<compile_context>
chip_gen: v7x
topology: tpu7x:2x2x1
jax: 0.10.0
libtpu: 0.0.40
codegen_flags: <defaults>
</compile_context>

<pallas_src>
import numpy as np
import jax
import jax.numpy as jnp
from jax.experimental import pallas as pl
from jax.experimental.pallas import tpu as pltpu


_VMEM = pl.BlockSpec(memory_space=pltpu.MemorySpace.VMEM)
_VMEM_LIMIT = 64 * 1024 * 1024


# ----------------------------- Pallas kernels ------------------------------


def conv_stack_kernel(x_ref, w_ref, gamma_ref, beta_ref, o_ref, xbuf):
    # x_ref:     (B, T, C)      f32 input (channels-last)
    # w_ref:     (L, K, Cin, Cout) bf16 conv weights
    # gamma_ref: (L, 1, C)      f32 BN weight
    # beta_ref:  (L, 1, C)      f32 BN bias
    # o_ref:     (B, T, C)      f32 output
    # xbuf:      (B, T + K - 1, C) bf16 VMEM scratch (activation + zero padding)
    B, T, C = o_ref.shape
    L, K = w_ref.shape[0], w_ref.shape[1]
    pad = (K - 1) // 2

    # Zero-init once: the pad rows stay zero for every layer, only the interior
    # [pad : pad+T] is ever (re)written -> implicit 'same' zero padding.
    xbuf[...] = jnp.zeros_like(xbuf)
    xbuf[:, pad:pad + T, :] = x_ref[...].astype(jnp.bfloat16)

    for l in range(L):                         # static unroll over layers
        acc = jnp.zeros((B * T, C), jnp.float32)
        for k in range(K):                     # static unroll over taps
            xs = xbuf[:, k:k + T, :].reshape(B * T, C)        # bf16, M = B*T
            acc = acc + jnp.dot(xs, w_ref[l, k],
                                preferred_element_type=jnp.float32)

        # Training-mode BatchNorm1d folded into one affine pass + ReLU.
        mean = jnp.mean(acc, axis=0, keepdims=True)
        var = jnp.mean((acc - mean) ** 2, axis=0, keepdims=True)
        scale = gamma_ref[l] * jax.lax.rsqrt(var + 1e-5)
        shift = beta_ref[l] - mean * scale
        y = jnp.maximum(acc * scale + shift, 0.0)

        if l == L - 1:
            o_ref[...] = y.reshape(B, T, C)
        else:
            xbuf[:, pad:pad + T, :] = y.reshape(B, T, C).astype(jnp.bfloat16)


def bilstm_kernel(x_ref, lens_ref, wih_ref, whh_f_ref, whh_b_ref, b_ref,
                  o_ref, gx_buf, h_f, c_f, h_b, c_b):
    # x_ref:     (T, B, C)  f32 time-major input
    # lens_ref:  (B, 1)     int32 sequence lengths
    # wih_ref:   (C, 8H)    bf16   [fwd | bwd] input weights (gate order i,f,g,o)
    # whh_*_ref: (H, 4H)    bf16   recurrent weights per direction
    # b_ref:     (1, 8H)    f32    combined biases (b_ih + b_hh), [fwd | bwd]
    # o_ref:     (T, B, 2H) f32    output, lanes [0:H] fwd, [H:2H] bwd
    # gx_buf:    (T, B, 8H) f32    hoisted input-projection gates
    # h_*, c_*:  (B, H)     f32    VMEM scratch states
    T, B, C = x_ref.shape
    H = h_f.shape[1]
    G4 = 4 * H

    # --- hoisted input projection for BOTH directions: one big MXU matmul ---
    xb = x_ref[...].reshape(T * B, C).astype(jnp.bfloat16)
    gx = jnp.dot(xb, wih_ref[...], preferred_element_type=jnp.float32) + b_ref[...]
    gx_buf[...] = gx.reshape(T, B, 8 * H)

    h_f[...] = jnp.zeros_like(h_f)
    c_f[...] = jnp.zeros_like(c_f)
    h_b[...] = jnp.zeros_like(h_b)
    c_b[...] = jnp.zeros_like(c_b)

    lens = lens_ref[...]                       # (B, 1) int32, read once

    def cell(gx_t, h, c, whh_ref):
        gates = gx_t + jnp.dot(h.astype(jnp.bfloat16), whh_ref[...],
                               preferred_element_type=jnp.float32)
        i_g = jax.nn.sigmoid(gates[:, 0:H])
        f_g = jax.nn.sigmoid(gates[:, H:2 * H])
        g_g = jnp.tanh(gates[:, 2 * H:3 * H])
        o_g = jax.nn.sigmoid(gates[:, 3 * H:4 * H])
        c_new = f_g * c + i_g * g_g
        h_new = o_g * jnp.tanh(c_new)
        return h_new, c_new

    def body(step, carry):
        tf = step
        tb = T - 1 - step

        # forward direction, timestep tf
        h_nf, c_nf = cell(gx_buf[tf, :, 0:G4], h_f[...], c_f[...], whh_f_ref)
        mf = tf < lens                                         # (B, 1) bool
        h_f[...] = jnp.where(mf, h_nf, h_f[...])
        c_f[...] = jnp.where(mf, c_nf, c_f[...])
        o_ref[tf, :, 0:H] = jnp.where(mf, h_nf, 0.0)           # zero past length

        # backward direction, timestep tb (independent -> co-issues with fwd)
        h_nb, c_nb = cell(gx_buf[tb, :, G4:2 * G4], h_b[...], c_b[...], whh_b_ref)
        mb = tb < lens
        h_b[...] = jnp.where(mb, h_nb, h_b[...])
        c_b[...] = jnp.where(mb, c_nb, c_b[...])
        o_ref[tb, :, H:2 * H] = jnp.where(mb, h_nb, 0.0)
        return carry

    jax.lax.fori_loop(0, T, body, 0)


# ------------------------------- wrappers -----------------------------------


def conv_stack(x_btc, w, gamma, beta, kernel_size):
    B, T, C = x_btc.shape
    pad = (kernel_size - 1) // 2
    return pl.pallas_call(
        conv_stack_kernel,
        out_shape=jax.ShapeDtypeStruct((B, T, C), jnp.float32),
        in_specs=[_VMEM] * 4,
        out_specs=_VMEM,
        scratch_shapes=[pltpu.VMEM((B, T + 2 * pad, C), jnp.bfloat16)],
        compiler_params=pltpu.CompilerParams(vmem_limit_bytes=_VMEM_LIMIT),
    )(x_btc, w, gamma, beta)


def bilstm(x_btc, lengths, wih, whh_f, whh_b, bias):
    B, T, C = x_btc.shape
    H = C // 2
    x_tbc = jnp.transpose(x_btc, (1, 0, 2))                    # (T, B, C)
    lens = jnp.asarray(lengths, jnp.int32).reshape(B, 1)
    return pl.pallas_call(
        bilstm_kernel,
        out_shape=jax.ShapeDtypeStruct((T, B, 2 * H), jnp.float32),
        in_specs=[_VMEM] * 6,
        out_specs=_VMEM,
        scratch_shapes=[pltpu.VMEM((T, B, 8 * H), jnp.float32),
                        pltpu.VMEM((B, H), jnp.float32),
                        pltpu.VMEM((B, H), jnp.float32),
                        pltpu.VMEM((B, H), jnp.float32),
                        pltpu.VMEM((B, H), jnp.float32)],
        compiler_params=pltpu.CompilerParams(vmem_limit_bytes=_VMEM_LIMIT),
    )(x_tbc, lens, wih, whh_f, whh_b, bias)


class EncoderPallas:
    def __init__(self, encoder_n_convolutions, encoder_embedding_dim,
                 encoder_kernel_size, key):
        C = encoder_embedding_dim
        K = encoder_kernel_size
        H = C // 2
        self.C, self.K, self.H = C, K, H

        keys = jax.random.split(key, encoder_n_convolutions * 3 + 8)
        ki = iter(keys)

        bound_c = 1.0 / np.sqrt(C * K)
        ws, gs, bs = [], [], []
        for _ in range(encoder_n_convolutions):
            # PyTorch Conv1d weight layout (Cout, Cin, K) -> kernel (K, Cin, Cout)
            w = jax.random.uniform(next(ki), (C, C, K), jnp.float32,
                                   -bound_c, bound_c)
            gs.append(jax.random.uniform(next(ki), (C,), jnp.float32, 0.5, 1.5))
            bs.append(jax.random.uniform(next(ki), (C,), jnp.float32, -0.1, 0.1))
            ws.append(jnp.transpose(w, (2, 1, 0)))
        # Conv1d bias is omitted: under training-mode BatchNorm a per-channel
        # constant shift cancels exactly in (x - mean).
        self.conv_w = jnp.stack(ws).astype(jnp.bfloat16)       # (L, K, C, C)
        self.conv_gamma = jnp.stack(gs)[:, None, :]            # (L, 1, C) f32
        self.conv_beta = jnp.stack(bs)[:, None, :]             # (L, 1, C) f32

        bound_l = 1.0 / np.sqrt(H)

        def lstm_dir():
            wih = jax.random.uniform(next(ki), (4 * H, C), jnp.float32,
                                     -bound_l, bound_l)
            whh = jax.random.uniform(next(ki), (4 * H, H), jnp.float32,
                                     -bound_l, bound_l)
            bih = jax.random.uniform(next(ki), (4 * H,), jnp.float32,
                                     -bound_l, bound_l)
            bhh = jax.random.uniform(next(ki), (4 * H,), jnp.float32,
                                     -bound_l, bound_l)
            return wih.T, whh.T, bih + bhh

        wih_f, whh_f, b_f = lstm_dir()
        wih_b, whh_b, b_b = lstm_dir()
        self.lstm_wih = jnp.concatenate([wih_f, wih_b], axis=1).astype(jnp.bfloat16)  # (C, 8H)
        self.lstm_whh_f = whh_f.astype(jnp.bfloat16)            # (H, 4H)
        self.lstm_whh_b = whh_b.astype(jnp.bfloat16)            # (H, 4H)
        self.lstm_b = jnp.concatenate([b_f, b_b]).reshape(1, 8 * H)  # f32

    def __call__(self, x_bct, text_lengths):
        # x_bct: (B, C, T) like PyTorch NCT input
        x = jnp.transpose(x_bct, (0, 2, 1)).astype(jnp.float32)  # (B, T, C)
        x = conv_stack(x, self.conv_w, self.conv_gamma, self.conv_beta, self.K)
        out_tbc = bilstm(x, text_lengths, self.lstm_wih,
                         self.lstm_whh_f, self.lstm_whh_b, self.lstm_b)
        out = jnp.transpose(out_tbc, (1, 0, 2))                  # (B, T, 2H)
        t_out = int(np.max(np.asarray(text_lengths)))            # pad_packed length
        return out[:, :t_out, :]


# --------------------------------- main --------------------------------------

if __name__ == "__main__":
    key = jax.random.PRNGKey(0)
    B, C, T = 2, 32, 8
    n_convs, kernel_size = 3, 5

    k_params, k_x = jax.random.split(key)
    enc = EncoderPallas(n_convs, C, kernel_size, k_params)

    x = jax.random.normal(k_x, (B, C, T), jnp.float32)
    # pack_padded_sequence default enforce_sorted=True -> lengths descending
    text_lengths = np.array([8, 5], dtype=np.int32)

    out = enc(x, text_lengths)
    out = jax.block_until_ready(out)

    assert out.shape == (B, int(text_lengths.max()), C), out.shape
    assert bool(jnp.all(jnp.isfinite(out)))
    # padded region of the shorter sequence must be zero (packed-sequence semantics)
    assert bool(jnp.all(out[1, int(text_lengths[1]):, :] == 0.0))
    print("KERNEL_OK")
</pallas_src>

<mosaic_0001>
module attributes {stable_mosaic.version = 11 : i64} {
  func.func @conv_stack_kernel(%arg0: memref<2x8x32xf32, #tpu.memory_space<vmem>>, %arg1: memref<3x5x32x32xbf16, #tpu.memory_space<vmem>>, %arg2: memref<3x1x32xf32, #tpu.memory_space<vmem>>, %arg3: memref<3x1x32xf32, #tpu.memory_space<vmem>>, %arg4: memref<2x8x32xf32, #tpu.memory_space<vmem>>, %arg5: memref<2x12x32xbf16, #tpu.memory_space<vmem>>) attributes {dimension_semantics = [], scalar_prefetch = 0 : i64, scratch_operands = 1 : i64, tpu.core_type = #tpu.core_type<tc>} {
    %cst = arith.constant 0.000000e+00 : bf16
    %0 = vector.broadcast %cst : bf16 to vector<2x12x32xbf16>
    %c0 = arith.constant 0 : index
    %c0_0 = arith.constant 0 : index
    %c0_1 = arith.constant 0 : index
    %1 = vector.load %arg5[%c0, %c0_0, %c0_1] : memref<2x12x32xbf16, #tpu.memory_space<vmem>>, vector<2x12x32xbf16>
    tpu.vector_store %arg5[%c0, %c0_0, %c0_1], %0 {strides = array<i32>} : memref<2x12x32xbf16, #tpu.memory_space<vmem>>, vector<2x12x32xbf16>,
    %c0_2 = arith.constant 0 : index
    %c0_3 = arith.constant 0 : index
    %c0_4 = arith.constant 0 : index
    %2 = vector.load %arg0[%c0_2, %c0_3, %c0_4] : memref<2x8x32xf32, #tpu.memory_space<vmem>>, vector<2x8x32xf32>
    %3 = arith.truncf %2 : vector<2x8x32xf32> to vector<2x8x32xbf16>
    %c0_5 = arith.constant 0 : index
    %c2 = arith.constant 2 : index
    %c0_6 = arith.constant 0 : index
    %4 = vector.load %arg5[%c0_5, %c2, %c0_6] : memref<2x12x32xbf16, #tpu.memory_space<vmem>>, vector<2x8x32xbf16>
    tpu.vector_store %arg5[%c0_5, %c2, %c0_6], %3 {strides = array<i32>} : memref<2x12x32xbf16, #tpu.memory_space<vmem>>, vector<2x8x32xbf16>,
    %cst_7 = arith.constant 0.000000e+00 : f32
    %5 = vector.broadcast %cst_7 : f32 to vector<16x32xf32>
    %c0_8 = arith.constant 0 : index
    %c0_9 = arith.constant 0 : index
    %c0_10 = arith.constant 0 : index
    %6 = vector.load %arg5[%c0_8, %c0_9, %c0_10] : memref<2x12x32xbf16, #tpu.memory_space<vmem>>, vector<2x8x32xbf16>
    %7 = vector.shape_cast %6 : vector<2x8x32xbf16> to vector<16x32xbf16>
    %c0_11 = arith.constant 0 : index
    %c0_12 = arith.constant 0 : index
    %c0_13 = arith.constant 0 : index
    %c0_14 = arith.constant 0 : index
    %8 = vector.load %arg1[%c0_11, %c0_12, %c0_13, %c0_14] : memref<3x5x32x32xbf16, #tpu.memory_space<vmem>>, vector<1x1x32x32xbf16>
    %9 = vector.shape_cast %8 : vector<1x1x32x32xbf16> to vector<32x32xbf16>
    %cst_15 = arith.constant dense<0.000000e+00> : vector<16x32xf32>
    %10 = tpu.matmul %7, %9, %cst_15 {dimension_numbers = #tpu.dot_dimension_numbers<[1], [0], [0], [1], [0, 0, 1, 1], [], []>} : vector<16x32xbf16>, vector<32x32xbf16>, vector<16x32xf32> -> vector<16x32xf32>
    %11 = arith.addf %5, %10 : vector<16x32xf32>
    %c0_16 = arith.constant 0 : index
    %c1 = arith.constant 1 : index
    %c0_17 = arith.constant 0 : index
    %12 = vector.load %arg5[%c0_16, %c1, %c0_17] : memref<2x12x32xbf16, #tpu.memory_space<vmem>>, vector<2x8x32xbf16>
    %13 = vector.shape_cast %12 : vector<2x8x32xbf16> to vector<16x32xbf16>
    %c0_18 = arith.constant 0 : index
    %c1_19 = arith.constant 1 : index
    %c0_20 = arith.constant 0 : index
    %c0_21 = arith.constant 0 : index
    %14 = vector.load %arg1[%c0_18, %c1_19, %c0_20, %c0_21] : memref<3x5x32x32xbf16, #tpu.memory_space<vmem>>, vector<1x1x32x32xbf16>
    %15 = vector.shape_cast %14 : vector<1x1x32x32xbf16> to vector<32x32xbf16>
    %cst_22 = arith.constant dense<0.000000e+00> : vector<16x32xf32>
    %16 = tpu.matmul %13, %15, %cst_22 {dimension_numbers = #tpu.dot_dimension_numbers<[1], [0], [0], [1], [0, 0, 1, 1], [], []>} : vector<16x32xbf16>, vector<32x32xbf16>, vector<16x32xf32> -> vector<16x32xf32>
    %17 = arith.addf %11, %16 : vector<16x32xf32>
    %c0_23 = arith.constant 0 : index
    %c2_24 = arith.constant 2 : index
    %c0_25 = arith.constant 0 : index
    %18 = vector.load %arg5[%c0_23, %c2_24, %c0_25] : memref<2x12x32xbf16, #tpu.memory_space<vmem>>, vector<2x8x32xbf16>
    %19 = vector.shape_cast %18 : vector<2x8x32xbf16> to vector<16x32xbf16>
    %c0_26 = arith.constant 0 : index
    %c2_27 = arith.constant 2 : index
    %c0_28 = arith.constant 0 : index
    %c0_29 = arith.constant 0 : index
    %20 = vector.load %arg1[%c0_26, %c2_27, %c0_28, %c0_29] : memref<3x5x32x32xbf16, #tpu.memory_space<vmem>>, vector<1x1x32x32xbf16>
    %21 = vector.shape_cast %20 : vector<1x1x32x32xbf16> to vector<32x32xbf16>
    %cst_30 = arith.constant dense<0.000000e+00> : vector<16x32xf32>
    %22 = tpu.matmul %19, %21, %cst_30 {dimension_numbers = #tpu.dot_dimension_numbers<[1], [0], [0], [1], [0, 0, 1, 1], [], []>} : vector<16x32xbf16>, vector<32x32xbf16>, vector<16x32xf32> -> vector<16x32xf32>
    %23 = arith.addf %17, %22 : vector<16x32xf32>
    %c0_31 = arith.constant 0 : index
    %c3 = arith.constant 3 : index
    %c0_32 = arith.constant 0 : index
    %24 = vector.load %arg5[%c0_31, %c3, %c0_32] : memref<2x12x32xbf16, #tpu.memory_space<vmem>>, vector<2x8x32xbf16>
    %25 = vector.shape_cast %24 : vector<2x8x32xbf16> to vector<16x32xbf16>
    %c0_33 = arith.constant 0 : index
    %c3_34 = arith.constant 3 : index
    %c0_35 = arith.constant 0 : index
    %c0_36 = arith.constant 0 : index
    %26 = vector.load %arg1[%c0_33, %c3_34, %c0_35, %c0_36] : memref<3x5x32x32xbf16, #tpu.memory_space<vmem>>, vector<1x1x32x32xbf16>
    %27 = vector.shape_cast %26 : vector<1x1x32x32xbf16> to vector<32x32xbf16>
    %cst_37 = arith.constant dense<0.000000e+00> : vector<16x32xf32>
    %28 = tpu.matmul %25, %27, %cst_37 {dimension_numbers = #tpu.dot_dimension_numbers<[1], [0], [0], [1], [0, 0, 1, 1], [], []>} : vector<16x32xbf16>, vector<32x32xbf16>, vector<16x32xf32> -> vector<16x32xf32>
    %29 = arith.addf %23, %28 : vector<16x32xf32>
    %c0_38 = arith.constant 0 : index
    %c4 = arith.constant 4 : index
    %c0_39 = arith.constant 0 : index
    %30 = vector.load %arg5[%c0_38, %c4, %c0_39] : memref<2x12x32xbf16, #tpu.memory_space<vmem>>, vector<2x8x32xbf16>
    %31 = vector.shape_cast %30 : vector<2x8x32xbf16> to vector<16x32xbf16>
    %c0_40 = arith.constant 0 : index
    %c4_41 = arith.constant 4 : index
    %c0_42 = arith.constant 0 : index
    %c0_43 = arith.constant 0 : index
    %32 = vector.load %arg1[%c0_40, %c4_41, %c0_42, %c0_43] : memref<3x5x32x32xbf16, #tpu.memory_space<vmem>>, vector<1x1x32x32xbf16>
    %33 = vector.shape_cast %32 : vector<1x1x32x32xbf16> to vector<32x32xbf16>
    %cst_44 = arith.constant dense<0.000000e+00> : vector<16x32xf32>
    %34 = tpu.matmul %31, %33, %cst_44 {dimension_numbers = #tpu.dot_dimension_numbers<[1], [0], [0], [1], [0, 0, 1, 1], [], []>} : vector<16x32xbf16>, vector<32x32xbf16>, vector<16x32xf32> -> vector<16x32xf32>
    %35 = arith.addf %29, %34 : vector<16x32xf32>
    %cst_45 = arith.constant dense<0.000000e+00> : vector<32xf32>
    %36 = vector.multi_reduction <add>, %35, %cst_45 [0] : vector<16x32xf32> to vector<32xf32>
    %37 = vector.shape_cast %36 : vector<32xf32> to vector<1x32xf32>
    %cst_46 = arith.constant 1.600000e+01 : f32
    %38 = vector.broadcast %cst_46 : f32 to vector<1x32xf32>
    %39 = arith.divf %37, %38 : vector<1x32xf32>
    %40 = vector.broadcast %39 : vector<1x32xf32> to vector<16x32xf32>
    %41 = arith.subf %35, %40 : vector<16x32xf32>
    %42 = arith.mulf %41, %41 : vector<16x32xf32>
    %cst_47 = arith.constant dense<0.000000e+00> : vector<32xf32>
    %43 = vector.multi_reduction <add>, %42, %cst_47 [0] : vector<16x32xf32> to vector<32xf32>
    %44 = vector.shape_cast %43 : vector<32xf32> to vector<1x32xf32>
    %cst_48 = arith.constant 1.600000e+01 : f32
    %45 = vector.broadcast %cst_48 : f32 to vector<1x32xf32>
    %46 = arith.divf %44, %45 : vector<1x32xf32>
    %c0_49 = arith.constant 0 : index
    %c0_50 = arith.constant 0 : index
    %c0_51 = arith.constant 0 : index
    %47 = vector.load %arg2[%c0_49, %c0_50, %c0_51] : memref<3x1x32xf32, #tpu.memory_space<vmem>>, vector<1x1x32xf32>
    %48 = vector.shape_cast %47 : vector<1x1x32xf32> to vector<1x32xf32>
    %cst_52 = arith.constant 9.99999974E-6 : f32
    %49 = vector.broadcast %cst_52 : f32 to vector<1x32xf32>
    %50 = arith.addf %46, %49 : vector<1x32xf32>
    %51 = math.rsqrt %50 : vector<1x32xf32>
    %52 = arith.mulf %48, %51 : vector<1x32xf32>
    %c0_53 = arith.constant 0 : index
    %c0_54 = arith.constant 0 : index
    %c0_55 = arith.constant 0 : index
    %53 = vector.load %arg3[%c0_53, %c0_54, %c0_55] : memref<3x1x32xf32, #tpu.memory_space<vmem>>, vector<1x1x32xf32>
    %54 = vector.shape_cast %53 : vector<1x1x32xf32> to vector<1x32xf32>
    %55 = arith.mulf %39, %52 : vector<1x32xf32>
    %56 = arith.subf %54, %55 : vector<1x32xf32>
    %57 = vector.broadcast %52 : vector<1x32xf32> to vector<16x32xf32>
    %58 = arith.mulf %35, %57 : vector<16x32xf32>
    %59 = vector.broadcast %56 : vector<1x32xf32> to vector<16x32xf32>
    %60 = arith.addf %58, %59 : vector<16x32xf32>
    %cst_56 = arith.constant 0.000000e+00 : f32
    %61 = vector.broadcast %cst_56 : f32 to vector<16x32xf32>
    %62 = arith.maximumf %60, %61 : vector<16x32xf32>
    %63 = vector.shape_cast %62 : vector<16x32xf32> to vector<2x8x32xf32>
    %64 = arith.truncf %63 : vector<2x8x32xf32> to vector<2x8x32xbf16>
    %c0_57 = arith.constant 0 : index
    %c2_58 = arith.constant 2 : index
    %c0_59 = arith.constant 0 : index
    %65 = vector.load %arg5[%c0_57, %c2_58, %c0_59] : memref<2x12x32xbf16, #tpu.memory_space<vmem>>, vector<2x8x32xbf16>
    tpu.vector_store %arg5[%c0_57, %c2_58, %c0_59], %64 {strides = array<i32>} : memref<2x12x32xbf16, #tpu.memory_space<vmem>>, vector<2x8x32xbf16>,
    %cst_60 = arith.constant 0.000000e+00 : f32
    %66 = vector.broadcast %cst_60 : f32 to vector<16x32xf32>
    %c0_61 = arith.constant 0 : index
    %c0_62 = arith.constant 0 : index
    %c0_63 = arith.constant 0 : index
    %67 = vector.load %arg5[%c0_61, %c0_62, %c0_63] : memref<2x12x32xbf16, #tpu.memory_space<vmem>>, vector<2x8x32xbf16>
    %68 = vector.shape_cast %67 : vector<2x8x32xbf16> to vector<16x32xbf16>
    %c1_64 = arith.constant 1 : index
    %c0_65 = arith.constant 0 : index
    %c0_66 = arith.constant 0 : index
    %c0_67 = arith.constant 0 : index
    %69 = vector.load %arg1[%c1_64, %c0_65, %c0_66, %c0_67] : memref<3x5x32x32xbf16, #tpu.memory_space<vmem>>, vector<1x1x32x32xbf16>
    %70 = vector.shape_cast %69 : vector<1x1x32x32xbf16> to vector<32x32xbf16>
    %cst_68 = arith.constant dense<0.000000e+00> : vector<16x32xf32>
    %71 = tpu.matmul %68, %70, %cst_68 {dimension_numbers = #tpu.dot_dimension_numbers<[1], [0], [0], [1], [0, 0, 1, 1], [], []>} : vector<16x32xbf16>, vector<32x32xbf16>, vector<16x32xf32> -> vector<16x32xf32>
    %72 = arith.addf %66, %71 : vector<16x32xf32>
    %c0_69 = arith.constant 0 : index
    %c1_70 = arith.constant 1 : index
    %c0_71 = arith.constant 0 : index
    %73 = vector.load %arg5[%c0_69, %c1_70, %c0_71] : memref<2x12x32xbf16, #tpu.memory_space<vmem>>, vector<2x8x32xbf16>
    %74 = vector.shape_cast %73 : vector<2x8x32xbf16> to vector<16x32xbf16>
    %c1_72 = arith.constant 1 : index
    %c1_73 = arith.constant 1 : index
    %c0_74 = arith.constant 0 : index
    %c0_75 = arith.constant 0 : index
    %75 = vector.load %arg1[%c1_72, %c1_73, %c0_74, %c0_75] : memref<3x5x32x32xbf16, #tpu.memory_space<vmem>>, vector<1x1x32x32xbf16>
    %76 = vector.shape_cast %75 : vector<1x1x32x32xbf16> to vector<32x32xbf16>
    %cst_76 = arith.constant dense<0.000000e+00> : vector<16x32xf32>
    %77 = tpu.matmul %74, %76, %cst_76 {dimension_numbers = #tpu.dot_dimension_numbers<[1], [0], [0], [1], [0, 0, 1, 1], [], []>} : vector<16x32xbf16>, vector<32x32xbf16>, vector<16x32xf32> -> vector<16x32xf32>
    %78 = arith.addf %72, %77 : vector<16x32xf32>
    %c0_77 = arith.constant 0 : index
    %c2_78 = arith.constant 2 : index
    %c0_79 = arith.constant 0 : index
    %79 = vector.load %arg5[%c0_77, %c2_78, %c0_79] : memref<2x12x32xbf16, #tpu.memory_space<vmem>>, vector<2x8x32xbf16>
    %80 = vector.shape_cast %79 : vector<2x8x32xbf16> to vector<16x32xbf16>
    %c1_80 = arith.constant 1 : index
    %c2_81 = arith.constant 2 : index
    %c0_82 = arith.constant 0 : index
    %c0_83 = arith.constant 0 : index
    %81 = vector.load %arg1[%c1_80, %c2_81, %c0_82, %c0_83] : memref<3x5x32x32xbf16, #tpu.memory_space<vmem>>, vector<1x1x32x32xbf16>
    %82 = vector.shape_cast %81 : vector<1x1x32x32xbf16> to vector<32x32xbf16>
    %cst_84 = arith.constant dense<0.000000e+00> : vector<16x32xf32>
    %83 = tpu.matmul %80, %82, %cst_84 {dimension_numbers = #tpu.dot_dimension_numbers<[1], [0], [0], [1], [0, 0, 1, 1], [], []>} : vector<16x32xbf16>, vector<32x32xbf16>, vector<16x32xf32> -> vector<16x32xf32>
    %84 = arith.addf %78, %83 : vector<16x32xf32>
    %c0_85 = arith.constant 0 : index
    %c3_86 = arith.constant 3 : index
    %c0_87 = arith.constant 0 : index
    %85 = vector.load %arg5[%c0_85, %c3_86, %c0_87] : memref<2x12x32xbf16, #tpu.memory_space<vmem>>, vector<2x8x32xbf16>
    %86 = vector.shape_cast %85 : vector<2x8x32xbf16> to vector<16x32xbf16>
    %c1_88 = arith.constant 1 : index
    %c3_89 = arith.constant 3 : index
    %c0_90 = arith.constant 0 : index
    %c0_91 = arith.constant 0 : index
    %87 = vector.load %arg1[%c1_88, %c3_89, %c0_90, %c0_91] : memref<3x5x32x32xbf16, #tpu.memory_space<vmem>>, vector<1x1x32x32xbf16>
    %88 = vector.shape_cast %87 : vector<1x1x32x32xbf16> to vector<32x32xbf16>
    %cst_92 = arith.constant dense<0.000000e+00> : vector<16x32xf32>
    %89 = tpu.matmul %86, %88, %cst_92 {dimension_numbers = #tpu.dot_dimension_numbers<[1], [0], [0], [1], [0, 0, 1, 1], [], []>} : vector<16x32xbf16>, vector<32x32xbf16>, vector<16x32xf32> -> vector<16x32xf32>
    %90 = arith.addf %84, %89 : vector<16x32xf32>
    %c0_93 = arith.constant 0 : index
    %c4_94 = arith.constant 4 : index
    %c0_95 = arith.constant 0 : index
    %91 = vector.load %arg5[%c0_93, %c4_94, %c0_95] : memref<2x12x32xbf16, #tpu.memory_space<vmem>>, vector<2x8x32xbf16>
    %92 = vector.shape_cast %91 : vector<2x8x32xbf16> to vector<16x32xbf16>
    %c1_96 = arith.constant 1 : index
    %c4_97 = arith.constant 4 : index
    %c0_98 = arith.constant 0 : index
    %c0_99 = arith.constant 0 : index
    %93 = vector.load %arg1[%c1_96, %c4_97, %c0_98, %c0_99] : memref<3x5x32x32xbf16, #tpu.memory_space<vmem>>, vector<1x1x32x32xbf16>
    %94 = vector.shape_cast %93 : vector<1x1x32x32xbf16> to vector<32x32xbf16>
    %cst_100 = arith.constant dense<0.000000e+00> : vector<16x32xf32>
    %95 = tpu.matmul %92, %94, %cst_100 {dimension_numbers = #tpu.dot_dimension_numbers<[1], [0], [0], [1], [0, 0, 1, 1], [], []>} : vector<16x32xbf16>, vector<32x32xbf16>, vector<16x32xf32> -> vector<16x32xf32>
    %96 = arith.addf %90, %95 : vector<16x32xf32>
    %cst_101 = arith.constant dense<0.000000e+00> : vector<32xf32>
    %97 = vector.multi_reduction <add>, %96, %cst_101 [0] : vector<16x32xf32> to vector<32xf32>
    %98 = vector.shape_cast %97 : vector<32xf32> to vector<1x32xf32>
    %cst_102 = arith.constant 1.600000e+01 : f32
    %99 = vector.broadcast %cst_102 : f32 to vector<1x32xf32>
    %100 = arith.divf %98, %99 : vector<1x32xf32>
    %101 = vector.broadcast %100 : vector<1x32xf32> to vector<16x32xf32>
    %102 = arith.subf %96, %101 : vector<16x32xf32>
    %103 = arith.mulf %102, %102 : vector<16x32xf32>
    %cst_103 = arith.constant dense<0.000000e+00> : vector<32xf32>
    %104 = vector.multi_reduction <add>, %103, %cst_103 [0] : vector<16x32xf32> to vector<32xf32>
    %105 = vector.shape_cast %104 : vector<32xf32> to vector<1x32xf32>
    %cst_104 = arith.constant 1.600000e+01 : f32
    %106 = vector.broadcast %cst_104 : f32 to vector<1x32xf32>
    %107 = arith.divf %105, %106 : vector<1x32xf32>
    %c1_105 = arith.constant 1 : index
    %c0_106 = arith.constant 0 : index
    %c0_107 = arith.constant 0 : index
    %108 = vector.load %arg2[%c1_105, %c0_106, %c0_107] : memref<3x1x32xf32, #tpu.memory_space<vmem>>, vector<1x1x32xf32>
    %109 = vector.shape_cast %108 : vector<1x1x32xf32> to vector<1x32xf32>
    %cst_108 = arith.constant 9.99999974E-6 : f32
    %110 = vector.broadcast %cst_108 : f32 to vector<1x32xf32>
    %111 = arith.addf %107, %110 : vector<1x32xf32>
    %112 = math.rsqrt %111 : vector<1x32xf32>
    %113 = arith.mulf %109, %112 : vector<1x32xf32>
    %c1_109 = arith.constant 1 : index
    %c0_110 = arith.constant 0 : index
    %c0_111 = arith.constant 0 : index
    %114 = vector.load %arg3[%c1_109, %c0_110, %c0_111] : memref<3x1x32xf32, #tpu.memory_space<vmem>>, vector<1x1x32xf32>
    %115 = vector.shape_cast %114 : vector<1x1x32xf32> to vector<1x32xf32>
    %116 = arith.mulf %100, %113 : vector<1x32xf32>
    %117 = arith.subf %115, %116 : vector<1x32xf32>
    %118 = vector.broadcast %113 : vector<1x32xf32> to vector<16x32xf32>
    %119 = arith.mulf %96, %118 : vector<16x32xf32>
    %120 = vector.broadcast %117 : vector<1x32xf32> to vector<16x32xf32>
    %121 = arith.addf %119, %120 : vector<16x32xf32>
    %cst_112 = arith.constant 0.000000e+00 : f32
    %122 = vector.broadcast %cst_112 : f32 to vector<16x32xf32>
    %123 = arith.maximumf %121, %122 : vector<16x32xf32>
    %124 = vector.shape_cast %123 : vector<16x32xf32> to vector<2x8x32xf32>
    %125 = arith.truncf %124 : vector<2x8x32xf32> to vector<2x8x32xbf16>
    %c0_113 = arith.constant 0 : index
    %c2_114 = arith.constant 2 : index
    %c0_115 = arith.constant 0 : index
    %126 = vector.load %arg5[%c0_113, %c2_114, %c0_115] : memref<2x12x32xbf16, #tpu.memory_space<vmem>>, vector<2x8x32xbf16>
    tpu.vector_store %arg5[%c0_113, %c2_114, %c0_115], %125 {strides = array<i32>} : memref<2x12x32xbf16, #tpu.memory_space<vmem>>, vector<2x8x32xbf16>,
    %cst_116 = arith.constant 0.000000e+00 : f32
    %127 = vector.broadcast %cst_116 : f32 to vector<16x32xf32>
    %c0_117 = arith.constant 0 : index
    %c0_118 = arith.constant 0 : index
    %c0_119 = arith.constant 0 : index
    %128 = vector.load %arg5[%c0_117, %c0_118, %c0_119] : memref<2x12x32xbf16, #tpu.memory_space<vmem>>, vector<2x8x32xbf16>
    %129 = vector.shape_cast %128 : vector<2x8x32xbf16> to vector<16x32xbf16>
    %c2_120 = arith.constant 2 : index
    %c0_121 = arith.constant 0 : index
    %c0_122 = arith.constant 0 : index
    %c0_123 = arith.constant 0 : index
    %130 = vector.load %arg1[%c2_120, %c0_121, %c0_122, %c0_123] : memref<3x5x32x32xbf16, #tpu.memory_space<vmem>>, vector<1x1x32x32xbf16>
    %131 = vector.shape_cast %130 : vector<1x1x32x32xbf16> to vector<32x32xbf16>
    %cst_124 = arith.constant dense<0.000000e+00> : vector<16x32xf32>
    %132 = tpu.matmul %129, %131, %cst_124 {dimension_numbers = #tpu.dot_dimension_numbers<[1], [0], [0], [1], [0, 0, 1, 1], [], []>} : vector<16x32xbf16>, vector<32x32xbf16>, vector<16x32xf32> -> vector<16x32xf32>
    %133 = arith.addf %127, %132 : vector<16x32xf32>
    %c0_125 = arith.constant 0 : index
    %c1_126 = arith.constant 1 : index
    %c0_127 = arith.constant 0 : index
    %134 = vector.load %arg5[%c0_125, %c1_126, %c0_127] : memref<2x12x32xbf16, #tpu.memory_space<vmem>>, vector<2x8x32xbf16>
    %135 = vector.shape_cast %134 : vector<2x8x32xbf16> to vector<16x32xbf16>
    %c2_128 = arith.constant 2 : index
    %c1_129 = arith.constant 1 : index
    %c0_130 = arith.constant 0 : index
    %c0_131 = arith.constant 0 : index
    %136 = vector.load %arg1[%c2_128, %c1_129, %c0_130, %c0_131] : memref<3x5x32x32xbf16, #tpu.memory_space<vmem>>, vector<1x1x32x32xbf16>
    %137 = vector.shape_cast %136 : vector<1x1x32x32xbf16> to vector<32x32xbf16>
    %cst_132 = arith.constant dense<0.000000e+00> : vector<16x32xf32>
    %138 = tpu.matmul %135, %137, %cst_132 {dimension_numbers = #tpu.dot_dimension_numbers<[1], [0], [0], [1], [0, 0, 1, 1], [], []>} : vector<16x32xbf16>, vector<32x32xbf16>, vector<16x32xf32> -> vector<16x32xf32>
    %139 = arith.addf %133, %138 : vector<16x32xf32>
    %c0_133 = arith.constant 0 : index
    %c2_134 = arith.constant 2 : index
    %c0_135 = arith.constant 0 : index
    %140 = vector.load %arg5[%c0_133, %c2_134, %c0_135] : memref<2x12x32xbf16, #tpu.memory_space<vmem>>, vector<2x8x32xbf16>
    %141 = vector.shape_cast %140 : vector<2x8x32xbf16> to vector<16x32xbf16>
    %c2_136 = arith.constant 2 : index
    %c2_137 = arith.constant 2 : index
    %c0_138 = arith.constant 0 : index
    %c0_139 = arith.constant 0 : index
    %142 = vector.load %arg1[%c2_136, %c2_137, %c0_138, %c0_139] : memref<3x5x32x32xbf16, #tpu.memory_space<vmem>>, vector<1x1x32x32xbf16>
    %143 = vector.shape_cast %142 : vector<1x1x32x32xbf16> to vector<32x32xbf16>
    %cst_140 = arith.constant dense<0.000000e+00> : vector<16x32xf32>
    %144 = tpu.matmul %141, %143, %cst_140 {dimension_numbers = #tpu.dot_dimension_numbers<[1], [0], [0], [1], [0, 0, 1, 1], [], []>} : vector<16x32xbf16>, vector<32x32xbf16>, vector<16x32xf32> -> vector<16x32xf32>
    %145 = arith.addf %139, %144 : vector<16x32xf32>
    %c0_141 = arith.constant 0 : index
    %c3_142 = arith.constant 3 : index
    %c0_143 = arith.constant 0 : index
    %146 = vector.load %arg5[%c0_141, %c3_142, %c0_143] : memref<2x12x32xbf16, #tpu.memory_space<vmem>>, vector<2x8x32xbf16>
    %147 = vector.shape_cast %146 : vector<2x8x32xbf16> to vector<16x32xbf16>
    %c2_144 = arith.constant 2 : index
    %c3_145 = arith.constant 3 : index
    %c0_146 = arith.constant 0 : index
    %c0_147 = arith.constant 0 : index
    %148 = vector.load %arg1[%c2_144, %c3_145, %c0_146, %c0_147] : memref<3x5x32x32xbf16, #tpu.memory_space<vmem>>, vector<1x1x32x32xbf16>
    %149 = vector.shape_cast %148 : vector<1x1x32x32xbf16> to vector<32x32xbf16>
    %cst_148 = arith.constant dense<0.000000e+00> : vector<16x32xf32>
    %150 = tpu.matmul %147, %149, %cst_148 {dimension_numbers = #tpu.dot_dimension_numbers<[1], [0], [0], [1], [0, 0, 1, 1], [], []>} : vector<16x32xbf16>, vector<32x32xbf16>, vector<16x32xf32> -> vector<16x32xf32>
    %151 = arith.addf %145, %150 : vector<16x32xf32>
    %c0_149 = arith.constant 0 : index
    %c4_150 = arith.constant 4 : index
    %c0_151 = arith.constant 0 : index
    %152 = vector.load %arg5[%c0_149, %c4_150, %c0_151] : memref<2x12x32xbf16, #tpu.memory_space<vmem>>, vector<2x8x32xbf16>
    %153 = vector.shape_cast %152 : vector<2x8x32xbf16> to vector<16x32xbf16>
    %c2_152 = arith.constant 2 : index
    %c4_153 = arith.constant 4 : index
    %c0_154 = arith.constant 0 : index
    %c0_155 = arith.constant 0 : index
    %154 = vector.load %arg1[%c2_152, %c4_153, %c0_154, %c0_155] : memref<3x5x32x32xbf16, #tpu.memory_space<vmem>>, vector<1x1x32x32xbf16>
    %155 = vector.shape_cast %154 : vector<1x1x32x32xbf16> to vector<32x32xbf16>
    %cst_156 = arith.constant dense<0.000000e+00> : vector<16x32xf32>
    %156 = tpu.matmul %153, %155, %cst_156 {dimension_numbers = #tpu.dot_dimension_numbers<[1], [0], [0], [1], [0, 0, 1, 1], [], []>} : vector<16x32xbf16>, vector<32x32xbf16>, vector<16x32xf32> -> vector<16x32xf32>
    %157 = arith.addf %151, %156 : vector<16x32xf32>
    %cst_157 = arith.constant dense<0.000000e+00> : vector<32xf32>
    %158 = vector.multi_reduction <add>, %157, %cst_157 [0] : vector<16x32xf32> to vector<32xf32>
    %159 = vector.shape_cast %158 : vector<32xf32> to vector<1x32xf32>
    %cst_158 = arith.constant 1.600000e+01 : f32
    %160 = vector.broadcast %cst_158 : f32 to vector<1x32xf32>
    %161 = arith.divf %159, %160 : vector<1x32xf32>
    %162 = vector.broadcast %161 : vector<1x32xf32> to vector<16x32xf32>
    %163 = arith.subf %157, %162 : vector<16x32xf32>
    %164 = arith.mulf %163, %163 : vector<16x32xf32>
    %cst_159 = arith.constant dense<0.000000e+00> : vector<32xf32>
    %165 = vector.multi_reduction <add>, %164, %cst_159 [0] : vector<16x32xf32> to vector<32xf32>
    %166 = vector.shape_cast %165 : vector<32xf32> to vector<1x32xf32>
    %cst_160 = arith.constant 1.600000e+01 : f32
    %167 = vector.broadcast %cst_160 : f32 to vector<1x32xf32>
    %168 = arith.divf %166, %167 : vector<1x32xf32>
    %c2_161 = arith.constant 2 : index
    %c0_162 = arith.constant 0 : index
    %c0_163 = arith.constant 0 : index
    %169 = vector.load %arg2[%c2_161, %c0_162, %c0_163] : memref<3x1x32xf32, #tpu.memory_space<vmem>>, vector<1x1x32xf32>
    %170 = vector.shape_cast %169 : vector<1x1x32xf32> to vector<1x32xf32>
    %cst_164 = arith.constant 9.99999974E-6 : f32
    %171 = vector.broadcast %cst_164 : f32 to vector<1x32xf32>
    %172 = arith.addf %168, %171 : vector<1x32xf32>
    %173 = math.rsqrt %172 : vector<1x32xf32>
    %174 = arith.mulf %170, %173 : vector<1x32xf32>
    %c2_165 = arith.constant 2 : index
    %c0_166 = arith.constant 0 : index
    %c0_167 = arith.constant 0 : index
    %175 = vector.load %arg3[%c2_165, %c0_166, %c0_167] : memref<3x1x32xf32, #tpu.memory_space<vmem>>, vector<1x1x32xf32>
    %176 = vector.shape_cast %175 : vector<1x1x32xf32> to vector<1x32xf32>
    %177 = arith.mulf %161, %174 : vector<1x32xf32>
    %178 = arith.subf %176, %177 : vector<1x32xf32>
    %179 = vector.broadcast %174 : vector<1x32xf32> to vector<16x32xf32>
    %180 = arith.mulf %157, %179 : vector<16x32xf32>
    %181 = vector.broadcast %178 : vector<1x32xf32> to vector<16x32xf32>
    %182 = arith.addf %180, %181 : vector<16x32xf32>
    %cst_168 = arith.constant 0.000000e+00 : f32
    %183 = vector.broadcast %cst_168 : f32 to vector<16x32xf32>
    %184 = arith.maximumf %182, %183 : vector<16x32xf32>
    %185 = vector.shape_cast %184 : vector<16x32xf32> to vector<2x8x32xf32>
    %c0_169 = arith.constant 0 : index
    %c0_170 = arith.constant 0 : index
    %c0_171 = arith.constant 0 : index
    %186 = vector.load %arg4[%c0_169, %c0_170, %c0_171] : memref<2x8x32xf32, #tpu.memory_space<vmem>>, vector<2x8x32xf32>
    tpu.vector_store %arg4[%c0_169, %c0_170, %c0_171], %185 {strides = array<i32>} : memref<2x8x32xf32, #tpu.memory_space<vmem>>, vector<2x8x32xf32>,
    return
  }
}

</mosaic_0001>

<llo_original>
// kernel: tpu_custom_call.1
$region0: #{tpu_custom_call.1}
  #allocation0 [shape = 'u32[]', space=smem, size = 0x4, offset = 0x4, fixed_abs, tag = 'smem constant byte address 0x4 - core index']
  #allocation1 [shape = 'u32[144,128]{1,0:T(1,128)}', space=vmem, size = 0x12000, scoped, tag = 'internal scratch']
  #allocation2 [shape = 'bf16[2,12,32]{2,1,0:T(8,128)(2,1)}', space=vmem, size = 0x2000, scoped, tag = 'scratch operand']
  %s0 = inlined_call_operand.hbm [shape: f32[2,8,32], index: 0, kind: input, shape index: {}]
  %s1 = inlined_call_operand.hbm [shape: bf16[3,5,32,32], index: 1, kind: input, shape index: {}]
  %s2 = inlined_call_operand.hbm [shape: f32[3,1,32], index: 2, kind: input, shape index: {}]
  %s3 = inlined_call_operand.hbm [shape: f32[3,1,32], index: 3, kind: input, shape index: {}]
  %s4 = inlined_call_operand.hbm [shape: f32[2,8,32], index: 4, kind: output, shape index: {}]
  %s5 = sld [smem:[#allocation0]]
  $region42: #{tpu_custom_call.1} parent=0
    _
  %s7 = ssub.s32 1, %s5
  %s8 = scalar_select 0, %s7, %s5
  $region1: #{tpu_custom_call.1} parent=0
    #allocation3 [shape = 'u8[8192]{0}', space=vmem, size = 0x2000, scoped, tag = 'input window, operand 0, single buffered']
    #allocation4 [shape = 's32[1]{0}', space=sflag, size = 0x4, scoped, tag = 'scoped memory for tpu_custom_call.1']
    #allocation5 [shape = 's32[1]{0}', space=sflag, size = 0x4, scoped, tag = 'scoped memory for tpu_custom_call.1']
    #allocation6 [shape = 'u8[122880]{0}', space=vmem, size = 0x1e000, scoped, tag = 'input window, operand 1, single buffered']
    #allocation7 [shape = 's32[1]{0}', space=sflag, size = 0x4, scoped, tag = 'scoped memory for tpu_custom_call.1']
    #allocation8 [shape = 'u8[1536]{0}', space=vmem, size = 0x800, scoped, tag = 'input window, operand 2, single buffered']
    #allocation9 [shape = 'u8[1536]{0}', space=vmem, size = 0x800, scoped, tag = 'input window, operand 3, single buffered']
    #allocation10 [shape = 's32[1]{0}', space=sflag, size = 0x4, scoped, tag = 'scoped memory for tpu_custom_call.1']
    #allocation11 [shape = 'u8[8192]{0}', space=vmem, size = 0x2000, scoped, tag = 'output window, operand 0, single buffered']
    %9 = vsyncpa [#allocation4], 0
    %10 = vsyncpa [#allocation7], 0
    %11 = vsyncpa [#allocation10], 0
    %12 = vsyncpa [#allocation5], 0
    // Predicated region
    $region2: #{tpu_custom_call.1} parent=1 // pred_check
      _
    $region3: #{tpu_custom_call.1} parent=1 // pred_check_branch
      %14 = sbr.rel (0) target = $region5
    $region4: #{tpu_custom_call.1} parent=1 // pred_region
      %s16 = ssub.s32 256, 256
      %17 = vsyncadd [#allocation4], %s16
      %s18 = sshll.u32 [#allocation3], 4
      %s19 = int_to_ptr.vmem [resolvable:$true] %s18
      %24 = dma.hbm_to_vmem [thread:$0]  %s0, 256, %s19, [#allocation4], 128, 128, 8
    $region5: #{tpu_custom_call.1} parent=1 // pred_fallthru
      _
    // Predicated region
    $region6: #{tpu_custom_call.1} parent=1 // pred_check
      _
    $region7: #{tpu_custom_call.1} parent=1 // pred_check_branch
      %26 = sbr.rel (0) target = $region9
    $region8: #{tpu_custom_call.1} parent=1 // pred_region
      %s28 = ssub.s32 3840, 3840
      %29 = vsyncadd [#allocation7], %s28
      %s30 = sshll.u32 [#allocation6], 4
      %s31 = int_to_ptr.vmem [resolvable:$true] %s30
      %36 = dma.hbm_to_vmem [thread:$0]  %s1, 3840, %s31, [#allocation7], 64, 64, 4
    $region9: #{tpu_custom_call.1} parent=1 // pred_fallthru
      _
    // Predicated region
    $region10: #{tpu_custom_call.1} parent=1 // pred_check
      _
    $region11: #{tpu_custom_call.1} parent=1 // pred_check_branch
      %38 = sbr.rel (0) target = $region13
    $region12: #{tpu_custom_call.1} parent=1 // pred_region
      %s40 = ssub.s32 48, 48
      %41 = vsyncadd [#allocation7], %s40
      %s42 = sshll.u32 [#allocation8], 4
      %s43 = int_to_ptr.vmem [resolvable:$true] %s42
      %48 = dma.hbm_to_vmem [thread:$0]  %s2, 48, %s43, [#allocation7], 16, 16, 1
    $region13: #{tpu_custom_call.1} parent=1 // pred_fallthru
      _
    // Predicated region
    $region14: #{tpu_custom_call.1} parent=1 // pred_check
      _
    $region15: #{tpu_custom_call.1} parent=1 // pred_check_branch
      %50 = sbr.rel (0) target = $region17
    $region16: #{tpu_custom_call.1} parent=1 // pred_region
      %s52 = ssub.s32 48, 48
      %53 = vsyncadd [#allocation10], %s52
      %s54 = sshll.u32 [#allocation9], 4
      %s55 = int_to_ptr.vmem [resolvable:$true] %s54
      %60 = dma.hbm_to_vmem [thread:$0]  %s3, 48, %s55, [#allocation10], 16, 16, 1
    $region17: #{tpu_custom_call.1} parent=1 // pred_fallthru
      _
    // Predicated region
    $region18: #{tpu_custom_call.1} parent=1 // pred_check
      _
    $region19: #{tpu_custom_call.1} parent=1 // pred_check_branch
      %62 = sbr.rel (0) target = $region21
    $region20: #{tpu_custom_call.1} parent=1 // pred_region
      %63 = dma.done [#allocation4], 256
    $region21: #{tpu_custom_call.1} parent=1 // pred_fallthru
      _
    // Predicated region
    $region22: #{tpu_custom_call.1} parent=1 // pred_check
      _
    $region23: #{tpu_custom_call.1} parent=1 // pred_check_branch
      %65 = sbr.rel (0) target = $region25
    $region24: #{tpu_custom_call.1} parent=1 // pred_region
      %66 = dma.done [#allocation7], 3840
    $region25: #{tpu_custom_call.1} parent=1 // pred_fallthru
      _
    // Predicated region
    $region26: #{tpu_custom_call.1} parent=1 // pred_check
      _
    $region27: #{tpu_custom_call.1} parent=1 // pred_check_branch
      %68 = sbr.rel (0) target = $region29
    $region28: #{tpu_custom_call.1} parent=1 // pred_region
      %69 = dma.done [#allocation7], 48
    $region29: #{tpu_custom_call.1} parent=1 // pred_fallthru
      _
    // Predicated region
    $region30: #{tpu_custom_call.1} parent=1 // pred_check
      _
    $region31: #{tpu_custom_call.1} parent=1 // pred_check_branch
      %71 = sbr.rel (0) target = $region33
    $region32: #{tpu_custom_call.1} parent=1 // pred_region
      %72 = dma.done [#allocation10], 48
    $region33: #{tpu_custom_call.1} parent=1 // pred_fallthru
      _
    %vm74 = vcmask 257024
    %75 = vst.msk [vmem:[#allocation2] sm:$0xf] %vm74, 0
    %vm76 = vcmask 254976
    %77 = vst.msk [vmem:[#allocation2 + $0x4] sm:$0x3] %vm76, 0
    %78 = vst.msk [vmem:[#allocation2 + $0x8] sm:$0xf] %vm74, 0
    %79 = vst.msk [vmem:[#allocation2 + $0xc] sm:$0x3] %vm76, 0
    %v80 = vld [vmem:[#allocation3] sm:$0xff]
    %v81 = vld [vmem:[#allocation3 + $0x8] sm:$0xff]
    %v82 = vpack.c.bf16 %v80, %v80
    %v83 = vpack.c.bf16 %v81, %v81
    %v86 = vunpack.c.l.b16 %v82
    %v87 = vunpack.c.l.b16 %v83
    %v88 = vpack.c.b16 %v86, %v86
    %v89 = vpack.c.b16 %v87, %v87
    %v90 = vrot.slane %v88, 7
    %v91 = vrot.slane %v90, 4
    %v92 = vrot.slane %v89, 7
    %v93 = vrot.slane %v92, 4
    %vm98 = vcmask 257025
    %99 = vst.msk [vmem:[#allocation2] sm:$0xe] %vm98, %v90
    %vm100 = vcmask 253952
    %101 = vst.msk [vmem:[#allocation2 + $0x4] sm:$0x1] %vm100, %v91
    %102 = vst.msk [vmem:[#allocation2 + $0x8] sm:$0xe] %vm98, %v92
    %103 = vst.msk [vmem:[#allocation2 + $0xc] sm:$0x1] %vm100, %v93
    %v104 = vld [vmem:[#allocation2] sm:$0xf]
    %v105 = vld [vmem:[#allocation2 + $0x8] sm:$0xf]
    %v106 = vld [vmem:[#allocation6] sm:$0xf]
    %v107 = vld [vmem:[#allocation6 + $0x4] sm:$0xf]
    %v108 = vld [vmem:[#allocation6 + $0x8] sm:$0xf]
    %v109 = vld [vmem:[#allocation6 + $0xc] sm:$0xf]
    %v110 = vld [vmem:[#allocation2 + $0x4] sm:$0x1]
    %v111 = vld [vmem:[#allocation2 + $0xc] sm:$0x1]
    %vm112 = vsmask.f32 3328
    %vm113 = vsmask.f32 7440
    %vm114 = vmor %vm112, %vm113
    %v116 = vshrl.u32 %v104, 16
    %v118 = vrot.slane %v116, 4
    %v119 = vshll.u32 %v104, 16
    %v121 = vrot.slane %v119, 5
    %v122 = vor.u32 %v118, %v121
    %v123 = vrot.slane %v122, 4
    %v125 = vshll.u32 %v110, 16
    %v127 = vrot.slane %v125, 5
    %v128 = vsel %vm114, %v123, %v127
    %v130 = vshrl.u32 %v105, 16
    %v132 = vrot.slane %v130, 4
    %v133 = vshll.u32 %v105, 16
    %v135 = vrot.slane %v133, 5
    %v136 = vor.u32 %v132, %v135
    %v137 = vrot.slane %v136, 4
    %v139 = vshll.u32 %v111, 16
    %v141 = vrot.slane %v139, 5
    %v142 = vsel %vm114, %v137, %v141
    %s143 = scalar_lea.vmem [#allocation6], 16
    %v144 = vld [vmem:[%s143] sm:$0xf]
    %v145 = vld [vmem:[%s143 + $0x4] sm:$0xf]
    %v146 = vld [vmem:[%s143 + $0x8] sm:$0xf]
    %v147 = vld [vmem:[%s143 + $0xc] sm:$0xf]
    %v148 = vunpack.c.l.b16 %v128
    %v149 = vunpack.c.l.b16 %v142
    %v150 = vpack.c.b16 %v149, %v148
    %v155 = vunpack.c.l.b16 %v144
    %v156 = vunpack.c.l.b16 %v145
    %v157 = vunpack.c.l.b16 %v146
    %v158 = vunpack.c.l.b16 %v147
    %v159 = vpack.c.b16 %v156, %v155
    %v160 = vpack.c.b16 %v158, %v157
    %vm163 = vcmask 261120
    %v165 = vsel %vm163, %v150, 0
    %167 = vmatprep.subr.bf16.mxu0 0
    %168 = vmatpush1.bf16.msra.mxu0 %v159
    %169 = vmatprep.subr.bf16.mxu0 0
    %170 = vmatpush1.bf16.msra.mxu0 %v160
    %171 = vmatprep.subr.bf16.mxu0 0
    %172 = vmatpush1.bf16.msra.mxu0 0
    %173 = vmatprep.subr.bf16.mxu0 0
    %174 = vmatpush1.bf16.msra.mxu0 0
    %175 = vmatprep.subr.bf16.mxu0 0
    %176 = vmatpush1.bf16.msra.mxu0 0
    %177 = vmatprep.subr.bf16.mxu0 0
    %178 = vmatpush1.bf16.msra.mxu0 0
    %179 = vmatprep.subr.bf16.mxu0 0
    %180 = vmatpush1.bf16.msra.mxu0 0
    %181 = vmatprep.subr.bf16.mxu0 0
    %182 = vmatpush1.bf16.msra.mxu0 0
    %183 = vmatprep.subr.bf16.mxu0 0
    %184 = vmatpush1.bf16.msra.mxu0 0
    %185 = vmatprep.subr.bf16.mxu0 0
    %186 = vmatpush1.bf16.msra.mxu0 0
    %187 = vmatprep.subr.bf16.mxu0 0
    %188 = vmatpush1.bf16.msra.mxu0 0
    %189 = vmatprep.subr.bf16.mxu0 0
    %190 = vmatpush1.bf16.msra.mxu0 0
    %191 = vmatprep.subr.bf16.mxu0 0
    %192 = vmatpush1.bf16.msra.mxu0 0
    %193 = vmatprep.subr.bf16.mxu0 0
    %194 = vmatpush1.bf16.msra.mxu0 0
    %195 = vmatprep.subr.bf16.mxu0 0
    %196 = vmatpush1.bf16.msra.mxu0 0
    %197 = vmatprep.subr.bf16.mxu0 0
    %198 = vmatpush1.bf16.msra.mxu0 0
    %199 = vmatprep.mubr.bf16.mxu0 0
    %200 = vmatmul.mubr.bf16.gmra.mrb[0].mxu0 %v165
    %v201 = vpop.f32.mrb[0].mxu0
    %v202 = vadd.f32 0.0, %v201
    %v203 = vpop.f32.mrb[0].mxu0
    %v204 = vpop.f32.mrb[0].mxu0
    %v205 = vadd.f32 0.0, %v204
    %v206 = vpop.f32.mrb[0].mxu0
    %207 = vdwg.mxu0
    %v210 = vunpack.c.l.b16 %v104
    %v211 = vunpack.c.l.b16 %v105
    %v212 = vpack.c.b16 %v211, %v210
    %v217 = vunpack.c.l.b16 %v106
    %v218 = vunpack.c.l.b16 %v107
    %v219 = vunpack.c.l.b16 %v108
    %v220 = vunpack.c.l.b16 %v109
    %v221 = vpack.c.b16 %v218, %v217
    %v222 = vpack.c.b16 %v220, %v219
    %v226 = vsel %vm163, %v212, 0
    %228 = vmatprep.subr.bf16.mxu0 0
    %229 = vmatpush1.bf16.msra.mxu0 %v221
    %230 = vmatprep.subr.bf16.mxu0 0
    %231 = vmatpush1.bf16.msra.mxu0 %v222
    %232 = vmatprep.subr.bf16.mxu0 0
    %233 = vmatpush1.bf16.msra.mxu0 0
    %234 = vmatprep.subr.bf16.mxu0 0
    %235 = vmatpush1.bf16.msra.mxu0 0
    %236 = vmatprep.subr.bf16.mxu0 0
    %237 = vmatpush1.bf16.msra.mxu0 0
    %238 = vmatprep.subr.bf16.mxu0 0
    %239 = vmatpush1.bf16.msra.mxu0 0
    %240 = vmatprep.subr.bf16.mxu0 0
    %241 = vmatpush1.bf16.msra.mxu0 0
    %242 = vmatprep.subr.bf16.mxu0 0
    %243 = vmatpush1.bf16.msra.mxu0 0
    %244 = vmatprep.subr.bf16.mxu0 0
    %245 = vmatpush1.bf16.msra.mxu0 0
    %246 = vmatprep.subr.bf16.mxu0 0
    %247 = vmatpush1.bf16.msra.mxu0 0
    %248 = vmatprep.subr.bf16.mxu0 0
    %249 = vmatpush1.bf16.msra.mxu0 0
    %250 = vmatprep.subr.bf16.mxu0 0
    %251 = vmatpush1.bf16.msra.mxu0 0
    %252 = vmatprep.subr.bf16.mxu0 0
    %253 = vmatpush1.bf16.msra.mxu0 0
    %254 = vmatprep.subr.bf16.mxu0 0
    %255 = vmatpush1.bf16.msra.mxu0 0
    %256 = vmatprep.subr.bf16.mxu0 0
    %257 = vmatpush1.bf16.msra.mxu0 0
    %258 = vmatprep.subr.bf16.mxu0 0
    %259 = vmatpush1.bf16.msra.mxu0 0
    %260 = vmatprep.mubr.bf16.mxu0 0
    %261 = vmatmul.mubr.bf16.gmra.mrb[0].mxu0 %v226
    %v262 = vpop.f32.mrb[0].mxu0
    %v263 = vadd.f32 %v202, %v262
    %v264 = vpop.f32.mrb[0].mxu0
    %v265 = vpop.f32.mrb[0].mxu0
    %v266 = vadd.f32 %v205, %v265
    %v267 = vpop.f32.mrb[0].mxu0
    %268 = vdwg.mxu0
    %v269 = vld [vmem:[#allocation2] sm:$0xe]
    %v270 = vld [vmem:[#allocation2 + $0x8] sm:$0xe]
    %vm275 = vcmask 1042432
    %vm276 = vcmask 1046532
    %vm277 = vmor %vm275, %vm276
    %v278 = vrot.slane %v269, 5
    %v279 = vrot.slane %v278, 4
    %v280 = vrot.slane %v110, 5
    %v281 = vsel %vm277, %v279, %v280
    %v282 = vrot.slane %v270, 5
    %v283 = vrot.slane %v282, 4
    %v284 = vrot.slane %v111, 5
    %v285 = vsel %vm277, %v283, %v284
    %s286 = scalar_lea.vmem [#allocation6], 32
    %v287 = vld [vmem:[%s286] sm:$0xf]
    %v288 = vld [vmem:[%s286 + $0x4] sm:$0xf]
    %v289 = vld [vmem:[%s286 + $0x8] sm:$0xf]
    %v290 = vld [vmem:[%s286 + $0xc] sm:$0xf]
    %v291 = vunpack.c.l.b16 %v281
    %v292 = vunpack.c.l.b16 %v285
    %v293 = vpack.c.b16 %v292, %v291
    %v298 = vunpack.c.l.b16 %v287
    %v299 = vunpack.c.l.b16 %v288
    %v300 = vunpack.c.l.b16 %v289
    %v301 = vunpack.c.l.b16 %v290
    %v302 = vpack.c.b16 %v299, %v298
    %v303 = vpack.c.b16 %v301, %v300
    %v307 = vsel %vm163, %v293, 0
    %309 = vmatprep.subr.bf16.mxu0 0
    %310 = vmatpush1.bf16.msra.mxu0 %v302
    %311 = vmatprep.subr.bf16.mxu0 0
    %312 = vmatpush1.bf16.msra.mxu0 %v303
    %313 = vmatprep.subr.bf16.mxu0 0
    %314 = vmatpush1.bf16.msra.mxu0 0
    %315 = vmatprep.subr.bf16.mxu0 0
    %316 = vmatpush1.bf16.msra.mxu0 0
    %317 = vmatprep.subr.bf16.mxu0 0
    %318 = vmatpush1.bf16.msra.mxu0 0
    %319 = vmatprep.subr.bf16.mxu0 0
    %320 = vmatpush1.bf16.msra.mxu0 0
    %321 = vmatprep.subr.bf16.mxu0 0
    %322 = vmatpush1.bf16.msra.mxu0 0
    %323 = vmatprep.subr.bf16.mxu0 0
    %324 = vmatpush1.bf16.msra.mxu0 0
    %325 = vmatprep.subr.bf16.mxu0 0
    %326 = vmatpush1.bf16.msra.mxu0 0
    %327 = vmatprep.subr.bf16.mxu0 0
    %328 = vmatpush1.bf16.msra.mxu0 0
    %329 = vmatprep.subr.bf16.mxu0 0
    %330 = vmatpush1.bf16.msra.mxu0 0
    %331 = vmatprep.subr.bf16.mxu0 0
    %332 = vmatpush1.bf16.msra.mxu0 0
    %333 = vmatprep.subr.bf16.mxu0 0
    %334 = vmatpush1.bf16.msra.mxu0 0
    %335 = vmatprep.subr.bf16.mxu0 0
    %336 = vmatpush1.bf16.msra.mxu0 0
    %337 = vmatprep.subr.bf16.mxu0 0
    %338 = vmatpush1.bf16.msra.mxu0 0
    %339 = vmatprep.subr.bf16.mxu0 0
    %340 = vmatpush1.bf16.msra.mxu0 0
    %341 = vmatprep.mubr.bf16.mxu0 0
    %342 = vmatmul.mubr.bf16.gmra.mrb[0].mxu0 %v307
    %v343 = vpop.f32.mrb[0].mxu0
    %v344 = vadd.f32 0.0, %v343
    %v345 = vpop.f32.mrb[0].mxu0
    %v346 = vpop.f32.mrb[0].mxu0
    %v347 = vadd.f32 0.0, %v346
    %v348 = vpop.f32.mrb[0].mxu0
    %349 = vdwg.mxu0
    %v350 = vadd.f32 %v263, %v344
    %v351 = vadd.f32 %v266, %v347
    %v352 = vld [vmem:[#allocation2 + $0x4] sm:$0x3]
    %v353 = vld [vmem:[#allocation2 + $0xc] sm:$0x3]
    %vm354 = vsmask.f32 2304
    %vm355 = vsmask.f32 6416
    %vm356 = vmor %vm354, %vm355
    %v358 = vshrl.u32 %v269, 16
    %v360 = vrot.slane %v358, 5
    %v361 = vshll.u32 %v269, 16
    %v363 = vrot.slane %v361, 6
    %v364 = vor.u32 %v360, %v363
    %v365 = vrot.slane %v364, 4
    %v367 = vshrl.u32 %v352, 16
    %v369 = vrot.slane %v367, 5
    %v370 = vshll.u32 %v352, 16
    %v372 = vrot.slane %v370, 6
    %v373 = vor.u32 %v369, %v372
    %v374 = vsel %vm356, %v365, %v373
    %v376 = vshrl.u32 %v270, 16
    %v378 = vrot.slane %v376, 5
    %v379 = vshll.u32 %v270, 16
    %v381 = vrot.slane %v379, 6
    %v382 = vor.u32 %v378, %v381
    %v383 = vrot.slane %v382, 4
    %v385 = vshrl.u32 %v353, 16
    %v387 = vrot.slane %v385, 5
    %v388 = vshll.u32 %v353, 16
    %v390 = vrot.slane %v388, 6
    %v391 = vor.u32 %v387, %v390
    %v392 = vsel %vm356, %v383, %v391
    %s393 = scalar_lea.vmem [#allocation6], 48
    %v394 = vld [vmem:[%s393] sm:$0xf]
    %v395 = vld [vmem:[%s393 + $0x4] sm:$0xf]
    %v396 = vld [vmem:[%s393 + $0x8] sm:$0xf]
    %v397 = vld [vmem:[%s393 + $0xc] sm:$0xf]
    %v398 = vunpack.c.l.b16 %v374
    %v399 = vunpack.c.l.b16 %v392
    %v400 = vpack.c.b16 %v399, %v398
    %v405 = vunpack.c.l.b16 %v394
    %v406 = vunpack.c.l.b16 %v395
    %v407 = vunpack.c.l.b16 %v396
    %v408 = vunpack.c.l.b16 %v397
    %v409 = vpack.c.b16 %v406, %v405
    %v410 = vpack.c.b16 %v408, %v407
    %v414 = vsel %vm163, %v400, 0
    %416 = vmatprep.subr.bf16.mxu0 0
    %417 = vmatpush1.bf16.msra.mxu0 %v409
    %418 = vmatprep.subr.bf16.mxu0 0
    %419 = vmatpush1.bf16.msra.mxu0 %v410
    %420 = vmatprep.subr.bf16.mxu0 0
    %421 = vmatpush1.bf16.msra.mxu0 0
    %422 = vmatprep.subr.bf16.mxu0 0
    %423 = vmatpush1.bf16.msra.mxu0 0
    %424 = vmatprep.subr.bf16.mxu0 0
    %425 = vmatpush1.bf16.msra.mxu0 0
    %426 = vmatprep.subr.bf16.mxu0 0
    %427 = vmatpush1.bf16.msra.mxu0 0
    %428 = vmatprep.subr.bf16.mxu0 0
    %429 = vmatpush1.bf16.msra.mxu0 0
    %430 = vmatprep.subr.bf16.mxu0 0
    %431 = vmatpush1.bf16.msra.mxu0 0
    %432 = vmatprep.subr.bf16.mxu0 0
    %433 = vmatpush1.bf16.msra.mxu0 0
    %434 = vmatprep.subr.bf16.mxu0 0
    %435 = vmatpush1.bf16.msra.mxu0 0
    %436 = vmatprep.subr.bf16.mxu0 0
    %437 = vmatpush1.bf16.msra.mxu0 0
    %438 = vmatprep.subr.bf16.mxu0 0
    %439 = vmatpush1.bf16.msra.mxu0 0
    %440 = vmatprep.subr.bf16.mxu0 0
    %441 = vmatpush1.bf16.msra.mxu0 0
    %442 = vmatprep.subr.bf16.mxu0 0
    %443 = vmatpush1.bf16.msra.mxu0 0
    %444 = vmatprep.subr.bf16.mxu0 0
    %445 = vmatpush1.bf16.msra.mxu0 0
    %446 = vmatprep.subr.bf16.mxu0 0
    %447 = vmatpush1.bf16.msra.mxu0 0
    %448 = vmatprep.mubr.bf16.mxu0 0
    %449 = vmatmul.mubr.bf16.gmra.mrb[0].mxu0 %v414
    %v450 = vpop.f32.mrb[0].mxu0
    %v451 = vadd.f32 0.0, %v450
    %v452 = vpop.f32.mrb[0].mxu0
    %v453 = vpop.f32.mrb[0].mxu0
    %v454 = vadd.f32 0.0, %v453
    %v455 = vpop.f32.mrb[0].mxu0
    %456 = vdwg.mxu0
    %v457 = vadd.f32 %v350, %v451
    %v458 = vadd.f32 %v351, %v454
    %v459 = vld [vmem:[#allocation2] sm:$0xc]
    %v460 = vld [vmem:[#allocation2 + $0x8] sm:$0xc]
    %vm465 = vcmask 1041408
    %vm466 = vcmask 1045508
    %vm467 = vmor %vm465, %vm466
    %v468 = vrot.slane %v459, 6
    %v469 = vrot.slane %v468, 4
    %v470 = vrot.slane %v352, 6
    %v471 = vsel %vm467, %v469, %v470
    %v472 = vrot.slane %v460, 6
    %v473 = vrot.slane %v472, 4
    %v474 = vrot.slane %v353, 6
    %v475 = vsel %vm467, %v473, %v474
    %s476 = scalar_lea.vmem [#allocation6], 64
    %v477 = vld [vmem:[%s476] sm:$0xf]
    %v478 = vld [vmem:[%s476 + $0x4] sm:$0xf]
    %v479 = vld [vmem:[%s476 + $0x8] sm:$0xf]
    %v480 = vld [vmem:[%s476 + $0xc] sm:$0xf]
    %v481 = vunpack.c.l.b16 %v471
    %v482 = vunpack.c.l.b16 %v475
    %v483 = vpack.c.b16 %v482, %v481
    %v488 = vunpack.c.l.b16 %v477
    %v489 = vunpack.c.l.b16 %v478
    %v490 = vunpack.c.l.b16 %v479
    %v491 = vunpack.c.l.b16 %v480
    %v492 = vpack.c.b16 %v489, %v488
    %v493 = vpack.c.b16 %v491, %v490
    %v497 = vsel %vm163, %v483, 0
    %499 = vmatprep.subr.bf16.mxu0 0
    %500 = vmatpush1.bf16.msra.mxu0 %v492
    %501 = vmatprep.subr.bf16.mxu0 0
    %502 = vmatpush1.bf16.msra.mxu0 %v493
    %503 = vmatprep.subr.bf16.mxu0 0
    %504 = vmatpush1.bf16.msra.mxu0 0
    %505 = vmatprep.subr.bf16.mxu0 0
    %506 = vmatpush1.bf16.msra.mxu0 0
    %507 = vmatprep.subr.bf16.mxu0 0
    %508 = vmatpush1.bf16.msra.mxu0 0
    %509 = vmatprep.subr.bf16.mxu0 0
    %510 = vmatpush1.bf16.msra.mxu0 0
    %511 = vmatprep.subr.bf16.mxu0 0
    %512 = vmatpush1.bf16.msra.mxu0 0
    %513 = vmatprep.subr.bf16.mxu0 0
    %514 = vmatpush1.bf16.msra.mxu0 0
    %515 = vmatprep.subr.bf16.mxu0 0
    %516 = vmatpush1.bf16.msra.mxu0 0
    %517 = vmatprep.subr.bf16.mxu0 0
    %518 = vmatpush1.bf16.msra.mxu0 0
    %519 = vmatprep.subr.bf16.mxu0 0
    %520 = vmatpush1.bf16.msra.mxu0 0
    %521 = vmatprep.subr.bf16.mxu0 0
    %522 = vmatpush1.bf16.msra.mxu0 0
    %523 = vmatprep.subr.bf16.mxu0 0
    %524 = vmatpush1.bf16.msra.mxu0 0
    %525 = vmatprep.subr.bf16.mxu0 0
    %526 = vmatpush1.bf16.msra.mxu0 0
    %527 = vmatprep.subr.bf16.mxu0 0
    %528 = vmatpush1.bf16.msra.mxu0 0
    %529 = vmatprep.subr.bf16.mxu0 0
    %530 = vmatpush1.bf16.msra.mxu0 0
    %531 = vmatprep.mubr.bf16.mxu0 0
    %532 = vmatmul.mubr.bf16.gmra.mrb[0].mxu0 %v497
    %v533 = vpop.f32.mrb[0].mxu0
    %v534 = vadd.f32 0.0, %v533
    %v535 = vpop.f32.mrb[0].mxu0
    %v536 = vpop.f32.mrb[0].mxu0
    %v537 = vadd.f32 0.0, %v536
    %v538 = vpop.f32.mrb[0].mxu0
    %539 = vdwg.mxu0
    %v540 = vadd.f32 %v457, %v534
    %v541 = vadd.f32 %v458, %v537
    %v542 = vsel %vm163, %v540, 0.0
    %v543 = vsel %vm163, %v541, 0.0
    %v544 = vadd.f32 %v542, %v543
    %v545 = vrot.slane %v544, 4
    %v546 = vadd.f32 %v544, %v545
    %v547 = vrot.slane %v546, 2
    %v548 = vadd.f32 %v546, %v547
    %v549 = vrot.slane %v548, 1
    %v550 = vadd.f32 %v548, %v549
    %v551 = vrcp.pop 16.0
    %v552 = vmul.f32 %v550, %v551
    %v553 = vsub.f32 %v540, %v552
    %v554 = vsub.f32 %v541, %v552
    %v555 = vmul.f32 %v553, %v553
    %v556 = vmul.f32 %v554, %v554
    %v557 = vsel %vm163, %v555, 0.0
    %v558 = vsel %vm163, %v556, 0.0
    %v559 = vadd.f32 %v557, %v558
    %v560 = vrot.slane %v559, 4
    %v561 = vadd.f32 %v559, %v560
    %v562 = vrot.slane %v561, 2
    %v563 = vadd.f32 %v561, %v562
    %v564 = vrot.slane %v563, 1
    %v565 = vadd.f32 %v563, %v564
    %v566 = vmul.f32 %v565, %v551
    %v567 = vld [vmem:[#allocation8] sm:$0x1]
    %v568 = vadd.f32 %v566, 1e-05
    %v569 = vrsqrt.pop %v568
    %v570 = vmul.f32 %v567, %v569
    %v571 = vld [vmem:[#allocation9] sm:$0x1]
    %v572 = vmul.f32 %v552, %v570
    %v573 = vsub.f32 %v571, %v572
    %v575 = vlaneseq
    %v576 = vshrl.u32 %v575, 7
    %v577 = vsub.s32 0, %v576
    %v578 = vrot.slane %v570, %v577
    %v580 = vmul.f32 %v540, %v578
    %v581 = vmul.f32 %v541, %v578
    %v583 = vlaneseq
    %v584 = vshrl.u32 %v583, 7
    %v585 = vsub.s32 0, %v584
    %v586 = vrot.slane %v573, %v585
    %v588 = vadd.f32 %v580, %v586
    %v589 = vadd.f32 %v581, %v586
    %v590 = vmax.f32 %v588, 0.0
    %v591 = vmax.f32 %v589, 0.0
    %v592 = vpack.c.bf16 %v590, %v590
    %v593 = vpack.c.bf16 %v591, %v591
    %v596 = vunpack.c.l.b16 %v592
    %v597 = vunpack.c.l.b16 %v593
    %v598 = vpack.c.b16 %v596, %v596
    %v599 = vpack.c.b16 %v597, %v597
    %v600 = vrot.slane %v598, 7
    %v601 = vrot.slane %v600, 4
    %v602 = vrot.slane %v599, 7
    %v603 = vrot.slane %v602, 4
    %608 = vst.msk [vmem:[#allocation2] sm:$0xe] %vm98, %v600
    %609 = vst.msk [vmem:[#allocation2 + $0x4] sm:$0x1] %vm100, %v601
    %610 = vst.msk [vmem:[#allocation2 + $0x8] sm:$0xe] %vm98, %v602
    %611 = vst.msk [vmem:[#allocation2 + $0xc] sm:$0x1] %vm100, %v603
    %v612 = vld [vmem:[#allocation2] sm:$0xf]
    %v613 = vld [vmem:[#allocation2 + $0x8] sm:$0xf]
    %s614 = scalar_lea.vmem [#allocation6], 80
    %v615 = vld [vmem:[%s614] sm:$0xf]
    %v616 = vld [vmem:[%s614 + $0x4] sm:$0xf]
    %v617 = vld [vmem:[%s614 + $0x8] sm:$0xf]
    %v618 = vld [vmem:[%s614 + $0xc] sm:$0xf]
    %v619 = vld [vmem:[#allocation2 + $0x4] sm:$0x1]
    %v620 = vld [vmem:[#allocation2 + $0xc] sm:$0x1]
    %v622 = vshrl.u32 %v612, 16
    %v624 = vrot.slane %v622, 4
    %v625 = vshll.u32 %v612, 16
    %v627 = vrot.slane %v625, 5
    %v628 = vor.u32 %v624, %v627
    %v629 = vrot.slane %v628, 4
    %v631 = vshll.u32 %v619, 16
    %v633 = vrot.slane %v631, 5
    %v634 = vsel %vm114, %v629, %v633
    %v636 = vshrl.u32 %v613, 16
    %v638 = vrot.slane %v636, 4
    %v639 = vshll.u32 %v613, 16
    %v641 = vrot.slane %v639, 5
    %v642 = vor.u32 %v638, %v641
    %v643 = vrot.slane %v642, 4
    %v645 = vshll.u32 %v620, 16
    %v647 = vrot.slane %v645, 5
    %v648 = vsel %vm114, %v643, %v647
    %s649 = scalar_lea.vmem [#allocation6], 96
    %v650 = vld [vmem:[%s649] sm:$0xf]
    %v651 = vld [vmem:[%s649 + $0x4] sm:$0xf]
    %v652 = vld [vmem:[%s649 + $0x8] sm:$0xf]
    %v653 = vld [vmem:[%s649 + $0xc] sm:$0xf]
    %v654 = vunpack.c.l.b16 %v634
    %v655 = vunpack.c.l.b16 %v648
    %v656 = vpack.c.b16 %v655, %v654
    %v661 = vunpack.c.l.b16 %v650
    %v662 = vunpack.c.l.b16 %v651
    %v663 = vunpack.c.l.b16 %v652
    %v664 = vunpack.c.l.b16 %v653
    %v665 = vpack.c.b16 %v662, %v661
    %v666 = vpack.c.b16 %v664, %v663
    %v670 = vsel %vm163, %v656, 0
    %672 = vmatprep.subr.bf16.mxu0 0
    %673 = vmatpush1.bf16.msra.mxu0 %v665
    %674 = vmatprep.subr.bf16.mxu0 0
    %675 = vmatpush1.bf16.msra.mxu0 %v666
    %676 = vmatprep.subr.bf16.mxu0 0
    %677 = vmatpush1.bf16.msra.mxu0 0
    %678 = vmatprep.subr.bf16.mxu0 0
    %679 = vmatpush1.bf16.msra.mxu0 0
    %680 = vmatprep.subr.bf16.mxu0 0
    %681 = vmatpush1.bf16.msra.mxu0 0
    %682 = vmatprep.subr.bf16.mxu0 0
    %683 = vmatpush1.bf16.msra.mxu0 0
    %684 = vmatprep.subr.bf16.mxu0 0
    %685 = vmatpush1.bf16.msra.mxu0 0
    %686 = vmatprep.subr.bf16.mxu0 0
    %687 = vmatpush1.bf16.msra.mxu0 0
    %688 = vmatprep.subr.bf16.mxu0 0
    %689 = vmatpush1.bf16.msra.mxu0 0
    %690 = vmatprep.subr.bf16.mxu0 0
    %691 = vmatpush1.bf16.msra.mxu0 0
    %692 = vmatprep.subr.bf16.mxu0 0
    %693 = vmatpush1.bf16.msra.mxu0 0
    %694 = vmatprep.subr.bf16.mxu0 0
    %695 = vmatpush1.bf16.msra.mxu0 0
    %696 = vmatprep.subr.bf16.mxu0 0
    %697 = vmatpush1.bf16.msra.mxu0 0
    %698 = vmatprep.subr.bf16.mxu0 0
    %699 = vmatpush1.bf16.msra.mxu0 0
    %700 = vmatprep.subr.bf16.mxu0 0
    %701 = vmatpush1.bf16.msra.mxu0 0
    %702 = vmatprep.subr.bf16.mxu0 0
    %703 = vmatpush1.bf16.msra.mxu0 0
    %704 = vmatprep.mubr.bf16.mxu0 0
    %705 = vmatmul.mubr.bf16.gmra.mrb[0].mxu0 %v670
    %v706 = vpop.f32.mrb[0].mxu0
    %v707 = vadd.f32 0.0, %v706
    %v708 = vpop.f32.mrb[0].mxu0
    %v709 = vpop.f32.mrb[0].mxu0
    %v710 = vadd.f32 0.0, %v709
    %v711 = vpop.f32.mrb[0].mxu0
    %712 = vdwg.mxu0
    %v715 = vunpack.c.l.b16 %v612
    %v716 = vunpack.c.l.b16 %v613
    %v717 = vpack.c.b16 %v716, %v715
    %v722 = vunpack.c.l.b16 %v615
    %v723 = vunpack.c.l.b16 %v616
    %v724 = vunpack.c.l.b16 %v617
    %v725 = vunpack.c.l.b16 %v618
    %v726 = vpack.c.b16 %v723, %v722
    %v727 = vpack.c.b16 %v725, %v724
    %v731 = vsel %vm163, %v717, 0
    %733 = vmatprep.subr.bf16.mxu0 0
    %734 = vmatpush1.bf16.msra.mxu0 %v726
    %735 = vmatprep.subr.bf16.mxu0 0
    %736 = vmatpush1.bf16.msra.mxu0 %v727
    %737 = vmatprep.subr.bf16.mxu0 0
    %738 = vmatpush1.bf16.msra.mxu0 0
    %739 = vmatprep.subr.bf16.mxu0 0
    %740 = vmatpush1.bf16.msra.mxu0 0
    %741 = vmatprep.subr.bf16.mxu0 0
    %742 = vmatpush1.bf16.msra.mxu0 0
    %743 = vmatprep.subr.bf16.mxu0 0
    %744 = vmatpush1.bf16.msra.mxu0 0
    %745 = vmatprep.subr.bf16.mxu0 0
    %746 = vmatpush1.bf16.msra.mxu0 0
    %747 = vmatprep.subr.bf16.mxu0 0
    %748 = vmatpush1.bf16.msra.mxu0 0
    %749 = vmatprep.subr.bf16.mxu0 0
    %750 = vmatpush1.bf16.msra.mxu0 0
    %751 = vmatprep.subr.bf16.mxu0 0
    %752 = vmatpush1.bf16.msra.mxu0 0
    %753 = vmatprep.subr.bf16.mxu0 0
    %754 = vmatpush1.bf16.msra.mxu0 0
    %755 = vmatprep.subr.bf16.mxu0 0
    %756 = vmatpush1.bf16.msra.mxu0 0
    %757 = vmatprep.subr.bf16.mxu0 0
    %758 = vmatpush1.bf16.msra.mxu0 0
    %759 = vmatprep.subr.bf16.mxu0 0
    %760 = vmatpush1.bf16.msra.mxu0 0
    %761 = vmatprep.subr.bf16.mxu0 0
    %762 = vmatpush1.bf16.msra.mxu0 0
    %763 = vmatprep.subr.bf16.mxu0 0
    %764 = vmatpush1.bf16.msra.mxu0 0
    %765 = vmatprep.mubr.bf16.mxu0 0
    %766 = vmatmul.mubr.bf16.gmra.mrb[0].mxu0 %v731
    %v767 = vpop.f32.mrb[0].mxu0
    %v768 = vadd.f32 %v707, %v767
    %v769 = vpop.f32.mrb[0].mxu0
    %v770 = vpop.f32.mrb[0].mxu0
    %v771 = vadd.f32 %v710, %v770
    %v772 = vpop.f32.mrb[0].mxu0
    %773 = vdwg.mxu0
    %v774 = vld [vmem:[#allocation2] sm:$0xe]
    %v775 = vld [vmem:[#allocation2 + $0x8] sm:$0xe]
    %v780 = vrot.slane %v774, 5
    %v781 = vrot.slane %v780, 4
    %v782 = vrot.slane %v619, 5
    %v783 = vsel %vm277, %v781, %v782
    %v784 = vrot.slane %v775, 5
    %v785 = vrot.slane %v784, 4
    %v786 = vrot.slane %v620, 5
    %v787 = vsel %vm277, %v785, %v786
    %s788 = scalar_lea.vmem [#allocation6], 112
    %v789 = vld [vmem:[%s788] sm:$0xf]
    %v790 = vld [vmem:[%s788 + $0x4] sm:$0xf]
    %v791 = vld [vmem:[%s788 + $0x8] sm:$0xf]
    %v792 = vld [vmem:[%s788 + $0xc] sm:$0xf]
    %v793 = vunpack.c.l.b16 %v783
    %v794 = vunpack.c.l.b16 %v787
    %v795 = vpack.c.b16 %v794, %v793
    %v800 = vunpack.c.l.b16 %v789
    %v801 = vunpack.c.l.b16 %v790
    %v802 = vunpack.c.l.b16 %v791
    %v803 = vunpack.c.l.b16 %v792
    %v804 = vpack.c.b16 %v801, %v800
    %v805 = vpack.c.b16 %v803, %v802
    %v809 = vsel %vm163, %v795, 0
    %811 = vmatprep.subr.bf16.mxu0 0
    %812 = vmatpush1.bf16.msra.mxu0 %v804
    %813 = vmatprep.subr.bf16.mxu0 0
    %814 = vmatpush1.bf16.msra.mxu0 %v805
    %815 = vmatprep.subr.bf16.mxu0 0
    %816 = vmatpush1.bf16.msra.mxu0 0
    %817 = vmatprep.subr.bf16.mxu0 0
    %818 = vmatpush1.bf16.msra.mxu0 0
    %819 = vmatprep.subr.bf16.mxu0 0
    %820 = vmatpush1.bf16.msra.mxu0 0
    %821 = vmatprep.subr.bf16.mxu0 0
    %822 = vmatpush1.bf16.msra.mxu0 0
    %823 = vmatprep.subr.bf16.mxu0 0
    %824 = vmatpush1.bf16.msra.mxu0 0
    %825 = vmatprep.subr.bf16.mxu0 0
    %826 = vmatpush1.bf16.msra.mxu0 0
    %827 = vmatprep.subr.bf16.mxu0 0
    %828 = vmatpush1.bf16.msra.mxu0 0
    %829 = vmatprep.subr.bf16.mxu0 0
    %830 = vmatpush1.bf16.msra.mxu0 0
    %831 = vmatprep.subr.bf16.mxu0 0
    %832 = vmatpush1.bf16.msra.mxu0 0
    %833 = vmatprep.subr.bf16.mxu0 0
    %834 = vmatpush1.bf16.msra.mxu0 0
    %835 = vmatprep.subr.bf16.mxu0 0
    %836 = vmatpush1.bf16.msra.mxu0 0
    %837 = vmatprep.subr.bf16.mxu0 0
    %838 = vmatpush1.bf16.msra.mxu0 0
    %839 = vmatprep.subr.bf16.mxu0 0
    %840 = vmatpush1.bf16.msra.mxu0 0
    %841 = vmatprep.subr.bf16.mxu0 0
    %842 = vmatpush1.bf16.msra.mxu0 0
    %843 = vmatprep.mubr.bf16.mxu0 0
    %844 = vmatmul.mubr.bf16.gmra.mrb[0].mxu0 %v809
    %v845 = vpop.f32.mrb[0].mxu0
    %v846 = vadd.f32 0.0, %v845
    %v847 = vpop.f32.mrb[0].mxu0
    %v848 = vpop.f32.mrb[0].mxu0
    %v849 = vadd.f32 0.0, %v848
    %v850 = vpop.f32.mrb[0].mxu0
    %851 = vdwg.mxu0
    %v852 = vadd.f32 %v768, %v846
    %v853 = vadd.f32 %v771, %v849
    %v854 = vld [vmem:[#allocation2 + $0x4] sm:$0x3]
    %v855 = vld [vmem:[#allocation2 + $0xc] sm:$0x3]
    %v857 = vshrl.u32 %v774, 16
    %v859 = vrot.slane %v857, 5
    %v860 = vshll.u32 %v774, 16
    %v862 = vrot.slane %v860, 6
    %v863 = vor.u32 %v859, %v862
    %v864 = vrot.slane %v863, 4
    %v866 = vshrl.u32 %v854, 16
    %v868 = vrot.slane %v866, 5
    %v869 = vshll.u32 %v854, 16
    %v871 = vrot.slane %v869, 6
    %v872 = vor.u32 %v868, %v871
    %v873 = vsel %vm356, %v864, %v872
    %v875 = vshrl.u32 %v775, 16
    %v877 = vrot.slane %v875, 5
    %v878 = vshll.u32 %v775, 16
    %v880 = vrot.slane %v878, 6
    %v881 = vor.u32 %v877, %v880
    %v882 = vrot.slane %v881, 4
    %v884 = vshrl.u32 %v855, 16
    %v886 = vrot.slane %v884, 5
    %v887 = vshll.u32 %v855, 16
    %v889 = vrot.slane %v887, 6
    %v890 = vor.u32 %v886, %v889
    %v891 = vsel %vm356, %v882, %v890
    %s892 = scalar_lea.vmem [#allocation6], 128
    %v893 = vld [vmem:[%s892] sm:$0xf]
    %v894 = vld [vmem:[%s892 + $0x4] sm:$0xf]
    %v895 = vld [vmem:[%s892 + $0x8] sm:$0xf]
    %v896 = vld [vmem:[%s892 + $0xc] sm:$0xf]
    %v897 = vunpack.c.l.b16 %v873
    %v898 = vunpack.c.l.b16 %v891
    %v899 = vpack.c.b16 %v898, %v897
    %v904 = vunpack.c.l.b16 %v893
    %v905 = vunpack.c.l.b16 %v894
    %v906 = vunpack.c.l.b16 %v895
    %v907 = vunpack.c.l.b16 %v896
    %v908 = vpack.c.b16 %v905, %v904
    %v909 = vpack.c.b16 %v907, %v906
    %v913 = vsel %vm163, %v899, 0
    %915 = vmatprep.subr.bf16.mxu0 0
    %916 = vmatpush1.bf16.msra.mxu0 %v908
    %917 = vmatprep.subr.bf16.mxu0 0
    %918 = vmatpush1.bf16.msra.mxu0 %v909
    %919 = vmatprep.subr.bf16.mxu0 0
    %920 = vmatpush1.bf16.msra.mxu0 0
    %921 = vmatprep.subr.bf16.mxu0 0
    %922 = vmatpush1.bf16.msra.mxu0 0
    %923 = vmatprep.subr.bf16.mxu0 0
    %924 = vmatpush1.bf16.msra.mxu0 0
    %925 = vmatprep.subr.bf16.mxu0 0
    %926 = vmatpush1.bf16.msra.mxu0 0
    %927 = vmatprep.subr.bf16.mxu0 0
    %928 = vmatpush1.bf16.msra.mxu0 0
    %929 = vmatprep.subr.bf16.mxu0 0
    %930 = vmatpush1.bf16.msra.mxu0 0
    %931 = vmatprep.subr.bf16.mxu0 0
    %932 = vmatpush1.bf16.msra.mxu0 0
    %933 = vmatprep.subr.bf16.mxu0 0
    %934 = vmatpush1.bf16.msra.mxu0 0
    %935 = vmatprep.subr.bf16.mxu0 0
    %936 = vmatpush1.bf16.msra.mxu0 0
    %937 = vmatprep.subr.bf16.mxu0 0
    %938 = vmatpush1.bf16.msra.mxu0 0
    %939 = vmatprep.subr.bf16.mxu0 0
    %940 = vmatpush1.bf16.msra.mxu0 0
    %941 = vmatprep.subr.bf16.mxu0 0
    %942 = vmatpush1.bf16.msra.mxu0 0
    %943 = vmatprep.subr.bf16.mxu0 0
    %944 = vmatpush1.bf16.msra.mxu0 0
    %945 = vmatprep.subr.bf16.mxu0 0
    %946 = vmatpush1.bf16.msra.mxu0 0
    %947 = vmatprep.mubr.bf16.mxu0 0
    %948 = vmatmul.mubr.bf16.gmra.mrb[0].mxu0 %v913
    %v949 = vpop.f32.mrb[0].mxu0
    %v950 = vadd.f32 0.0, %v949
    %v951 = vpop.f32.mrb[0].mxu0
    %v952 = vpop.f32.mrb[0].mxu0
    %v953 = vadd.f32 0.0, %v952
    %v954 = vpop.f32.mrb[0].mxu0
    %955 = vdwg.mxu0
    %v956 = vadd.f32 %v852, %v950
    %v957 = vadd.f32 %v853, %v953
    %v958 = vld [vmem:[#allocation2] sm:$0xc]
    %v959 = vld [vmem:[#allocation2 + $0x8] sm:$0xc]
    %v964 = vrot.slane %v958, 6
    %v965 = vrot.slane %v964, 4
    %v966 = vrot.slane %v854, 6
    %v967 = vsel %vm467, %v965, %v966
    %v968 = vrot.slane %v959, 6
    %v969 = vrot.slane %v968, 4
    %v970 = vrot.slane %v855, 6
    %v971 = vsel %vm467, %v969, %v970
    %s972 = scalar_lea.vmem [#allocation6], 144
    %v973 = vld [vmem:[%s972] sm:$0xf]
    %v974 = vld [vmem:[%s972 + $0x4] sm:$0xf]
    %v975 = vld [vmem:[%s972 + $0x8] sm:$0xf]
    %v976 = vld [vmem:[%s972 + $0xc] sm:$0xf]
    %v977 = vunpack.c.l.b16 %v967
    %v978 = vunpack.c.l.b16 %v971
    %v979 = vpack.c.b16 %v978, %v977
    %v984 = vunpack.c.l.b16 %v973
    %v985 = vunpack.c.l.b16 %v974
    %v986 = vunpack.c.l.b16 %v975
    %v987 = vunpack.c.l.b16 %v976
    %v988 = vpack.c.b16 %v985, %v984
    %v989 = vpack.c.b16 %v987, %v986
    %v993 = vsel %vm163, %v979, 0
    %995 = vmatprep.subr.bf16.mxu0 0
    %996 = vmatpush1.bf16.msra.mxu0 %v988
    %997 = vmatprep.subr.bf16.mxu0 0
    %998 = vmatpush1.bf16.msra.mxu0 %v989
    %999 = vmatprep.subr.bf16.mxu0 0
    %1000 = vmatpush1.bf16.msra.mxu0 0
    %1001 = vmatprep.subr.bf16.mxu0 0
    %1002 = vmatpush1.bf16.msra.mxu0 0
    %1003 = vmatprep.subr.bf16.mxu0 0
    %1004 = vmatpush1.bf16.msra.mxu0 0
    %1005 = vmatprep.subr.bf16.mxu0 0
    %1006 = vmatpush1.bf16.msra.mxu0 0
    %1007 = vmatprep.subr.bf16.mxu0 0
    %1008 = vmatpush1.bf16.msra.mxu0 0
    %1009 = vmatprep.subr.bf16.mxu0 0
    %1010 = vmatpush1.bf16.msra.mxu0 0
    %1011 = vmatprep.subr.bf16.mxu0 0
    %1012 = vmatpush1.bf16.msra.mxu0 0
    %1013 = vmatprep.subr.bf16.mxu0 0
    %1014 = vmatpush1.bf16.msra.mxu0 0
    %1015 = vmatprep.subr.bf16.mxu0 0
    %1016 = vmatpush1.bf16.msra.mxu0 0
    %1017 = vmatprep.subr.bf16.mxu0 0
    %1018 = vmatpush1.bf16.msra.mxu0 0
    %1019 = vmatprep.subr.bf16.mxu0 0
    %1020 = vmatpush1.bf16.msra.mxu0 0
    %1021 = vmatprep.subr.bf16.mxu0 0
    %1022 = vmatpush1.bf16.msra.mxu0 0
    %1023 = vmatprep.subr.bf16.mxu0 0
    %1024 = vmatpush1.bf16.msra.mxu0 0
    %1025 = vmatprep.subr.bf16.mxu0 0
    %1026 = vmatpush1.bf16.msra.mxu0 0
    %1027 = vmatprep.mubr.bf16.mxu0 0
    %1028 = vmatmul.mubr.bf16.gmra.mrb[0].mxu0 %v993
    %v1029 = vpop.f32.mrb[0].mxu0
    %v1030 = vadd.f32 0.0, %v1029
    %v1031 = vpop.f32.mrb[0].mxu0
    %v1032 = vpop.f32.mrb[0].mxu0
    %v1033 = vadd.f32 0.0, %v1032
    %v1034 = vpop.f32.mrb[0].mxu0
    %1035 = vdwg.mxu0
    %v1036 = vadd.f32 %v956, %v1030
    %v1037 = vadd.f32 %v957, %v1033
    %v1038 = vsel %vm163, %v1036, 0.0
    %v1039 = vsel %vm163, %v1037, 0.0
    %v1040 = vadd.f32 %v1038, %v1039
    %v1041 = vrot.slane %v1040, 4
    %v1042 = vadd.f32 %v1040, %v1041
    %v1043 = vrot.slane %v1042, 2
    %v1044 = vadd.f32 %v1042, %v1043
    %v1045 = vrot.slane %v1044, 1
    %v1046 = vadd.f32 %v1044, %v1045
    %v1047 = vmul.f32 %v1046, %v551
    %v1048 = vsub.f32 %v1036, %v1047
    %v1049 = vsub.f32 %v1037, %v1047
    %v1050 = vmul.f32 %v1048, %v1048
    %v1051 = vmul.f32 %v1049, %v1049
    %v1052 = vsel %vm163, %v1050, 0.0
    %v1053 = vsel %vm163, %v1051, 0.0
    %v1054 = vadd.f32 %v1052, %v1053
    %v1055 = vrot.slane %v1054, 4
    %v1056 = vadd.f32 %v1054, %v1055
    %v1057 = vrot.slane %v1056, 2
    %v1058 = vadd.f32 %v1056, %v1057
    %v1059 = vrot.slane %v1058, 1
    %v1060 = vadd.f32 %v1058, %v1059
    %v1061 = vmul.f32 %v1060, %v551
    %s1062 = scalar_lea.vmem [#allocation8], 1
    %v1063 = vld [vmem:[%s1062] sm:$0x1]
    %v1064 = vadd.f32 %v1061, 1e-05
    %v1065 = vrsqrt.pop %v1064
    %v1066 = vmul.f32 %v1063, %v1065
    %s1067 = scalar_lea.vmem [#allocation9], 1
    %v1068 = vld [vmem:[%s1067] sm:$0x1]
    %v1069 = vmul.f32 %v1047, %v1066
    %v1070 = vsub.f32 %v1068, %v1069
    %v1072 = vlaneseq
    %v1073 = vshrl.u32 %v1072, 7
    %v1074 = vsub.s32 0, %v1073
    %v1075 = vrot.slane %v1066, %v1074
    %v1077 = vmul.f32 %v1036, %v1075
    %v1078 = vmul.f32 %v1037, %v1075
    %v1080 = vlaneseq
    %v1081 = vshrl.u32 %v1080, 7
    %v1082 = vsub.s32 0, %v1081
    %v1083 = vrot.slane %v1070, %v1082
    %v1085 = vadd.f32 %v1077, %v1083
    %v1086 = vadd.f32 %v1078, %v1083
    %v1087 = vmax.f32 %v1085, 0.0
    %v1088 = vmax.f32 %v1086, 0.0
    %v1089 = vpack.c.bf16 %v1087, %v1087
    %v1090 = vpack.c.bf16 %v1088, %v1088
    %v1093 = vunpack.c.l.b16 %v1089
    %v1094 = vunpack.c.l.b16 %v1090
    %v1095 = vpack.c.b16 %v1093, %v1093
    %v1096 = vpack.c.b16 %v1094, %v1094
    %v1097 = vrot.slane %v1095, 7
    %v1098 = vrot.slane %v1097, 4
    %v1099 = vrot.slane %v1096, 7
    %v1100 = vrot.slane %v1099, 4
    %1105 = vst.msk [vmem:[#allocation2] sm:$0xe] %vm98, %v1097
    %1106 = vst.msk [vmem:[#allocation2 + $0x4] sm:$0x1] %vm100, %v1098
    %1107 = vst.msk [vmem:[#allocation2 + $0x8] sm:$0xe] %vm98, %v1099
    %1108 = vst.msk [vmem:[#allocation2 + $0xc] sm:$0x1] %vm100, %v1100
    %v1109 = vld [vmem:[#allocation2] sm:$0xf]
    %v1110 = vld [vmem:[#allocation2 + $0x8] sm:$0xf]
    %s1111 = scalar_lea.vmem [#allocation6], 160
    %v1112 = vld [vmem:[%s1111] sm:$0xf]
    %v1113 = vld [vmem:[%s1111 + $0x4] sm:$0xf]
    %v1114 = vld [vmem:[%s1111 + $0x8] sm:$0xf]
    %v1115 = vld [vmem:[%s1111 + $0xc] sm:$0xf]
    %v1116 = vld [vmem:[#allocation2 + $0x4] sm:$0x1]
    %v1117 = vld [vmem:[#allocation2 + $0xc] sm:$0x1]
    %v1119 = vshrl.u32 %v1109, 16
    %v1121 = vrot.slane %v1119, 4
    %v1122 = vshll.u32 %v1109, 16
    %v1124 = vrot.slane %v1122, 5
    %v1125 = vor.u32 %v1121, %v1124
    %v1126 = vrot.slane %v1125, 4
    %v1128 = vshll.u32 %v1116, 16
    %v1130 = vrot.slane %v1128, 5
    %v1131 = vsel %vm114, %v1126, %v1130
    %v1133 = vshrl.u32 %v1110, 16
    %v1135 = vrot.slane %v1133, 4
    %v1136 = vshll.u32 %v1110, 16
    %v1138 = vrot.slane %v1136, 5
    %v1139 = vor.u32 %v1135, %v1138
    %v1140 = vrot.slane %v1139, 4
    %v1142 = vshll.u32 %v1117, 16
    %v1144 = vrot.slane %v1142, 5
    %v1145 = vsel %vm114, %v1140, %v1144
    %s1146 = scalar_lea.vmem [#allocation6], 176
    %v1147 = vld [vmem:[%s1146] sm:$0xf]
    %v1148 = vld [vmem:[%s1146 + $0x4] sm:$0xf]
    %v1149 = vld [vmem:[%s1146 + $0x8] sm:$0xf]
    %v1150 = vld [vmem:[%s1146 + $0xc] sm:$0xf]
    %v1151 = vunpack.c.l.b16 %v1131
    %v1152 = vunpack.c.l.b16 %v1145
    %v1153 = vpack.c.b16 %v1152, %v1151
    %v1158 = vunpack.c.l.b16 %v1147
    %v1159 = vunpack.c.l.b16 %v1148
    %v1160 = vunpack.c.l.b16 %v1149
    %v1161 = vunpack.c.l.b16 %v1150
    %v1162 = vpack.c.b16 %v1159, %v1158
    %v1163 = vpack.c.b16 %v1161, %v1160
    %v1167 = vsel %vm163, %v1153, 0
    %1169 = vmatprep.subr.bf16.mxu0 0
    %1170 = vmatpush1.bf16.msra.mxu0 %v1162
    %1171 = vmatprep.subr.bf16.mxu0 0
    %1172 = vmatpush1.bf16.msra.mxu0 %v1163
    %1173 = vmatprep.subr.bf16.mxu0 0
    %1174 = vmatpush1.bf16.msra.mxu0 0
    %1175 = vmatprep.subr.bf16.mxu0 0
    %1176 = vmatpush1.bf16.msra.mxu0 0
    %1177 = vmatprep.subr.bf16.mxu0 0
    %1178 = vmatpush1.bf16.msra.mxu0 0
    %1179 = vmatprep.subr.bf16.mxu0 0
    %1180 = vmatpush1.bf16.msra.mxu0 0
    %1181 = vmatprep.subr.bf16.mxu0 0
    %1182 = vmatpush1.bf16.msra.mxu0 0
    %1183 = vmatprep.subr.bf16.mxu0 0
    %1184 = vmatpush1.bf16.msra.mxu0 0
    %1185 = vmatprep.subr.bf16.mxu0 0
    %1186 = vmatpush1.bf16.msra.mxu0 0
    %1187 = vmatprep.subr.bf16.mxu0 0
    %1188 = vmatpush1.bf16.msra.mxu0 0
    %1189 = vmatprep.subr.bf16.mxu0 0
    %1190 = vmatpush1.bf16.msra.mxu0 0
    %1191 = vmatprep.subr.bf16.mxu0 0
    %1192 = vmatpush1.bf16.msra.mxu0 0
    %1193 = vmatprep.subr.bf16.mxu0 0
    %1194 = vmatpush1.bf16.msra.mxu0 0
    %1195 = vmatprep.subr.bf16.mxu0 0
    %1196 = vmatpush1.bf16.msra.mxu0 0
    %1197 = vmatprep.subr.bf16.mxu0 0
    %1198 = vmatpush1.bf16.msra.mxu0 0
    %1199 = vmatprep.subr.bf16.mxu0 0
    %1200 = vmatpush1.bf16.msra.mxu0 0
    %1201 = vmatprep.mubr.bf16.mxu0 0
    %1202 = vmatmul.mubr.bf16.gmra.mrb[0].mxu0 %v1167
    %v1203 = vpop.f32.mrb[0].mxu0
    %v1204 = vadd.f32 0.0, %v1203
    %v1205 = vpop.f32.mrb[0].mxu0
    %v1206 = vpop.f32.mrb[0].mxu0
    %v1207 = vadd.f32 0.0, %v1206
    %v1208 = vpop.f32.mrb[0].mxu0
    %1209 = vdwg.mxu0
    %v1212 = vunpack.c.l.b16 %v1109
    %v1213 = vunpack.c.l.b16 %v1110
    %v1214 = vpack.c.b16 %v1213, %v1212
    %v1219 = vunpack.c.l.b16 %v1112
    %v1220 = vunpack.c.l.b16 %v1113
    %v1221 = vunpack.c.l.b16 %v1114
    %v1222 = vunpack.c.l.b16 %v1115
    %v1223 = vpack.c.b16 %v1220, %v1219
    %v1224 = vpack.c.b16 %v1222, %v1221
    %v1228 = vsel %vm163, %v1214, 0
    %1230 = vmatprep.subr.bf16.mxu0 0
    %1231 = vmatpush1.bf16.msra.mxu0 %v1223
    %1232 = vmatprep.subr.bf16.mxu0 0
    %1233 = vmatpush1.bf16.msra.mxu0 %v1224
    %1234 = vmatprep.subr.bf16.mxu0 0
    %1235 = vmatpush1.bf16.msra.mxu0 0
    %1236 = vmatprep.subr.bf16.mxu0 0
    %1237 = vmatpush1.bf16.msra.mxu0 0
    %1238 = vmatprep.subr.bf16.mxu0 0
    %1239 = vmatpush1.bf16.msra.mxu0 0
    %1240 = vmatprep.subr.bf16.mxu0 0
    %1241 = vmatpush1.bf16.msra.mxu0 0
    %1242 = vmatprep.subr.bf16.mxu0 0
    %1243 = vmatpush1.bf16.msra.mxu0 0
    %1244 = vmatprep.subr.bf16.mxu0 0
    %1245 = vmatpush1.bf16.msra.mxu0 0
    %1246 = vmatprep.subr.bf16.mxu0 0
    %1247 = vmatpush1.bf16.msra.mxu0 0
    %1248 = vmatprep.subr.bf16.mxu0 0
    %1249 = vmatpush1.bf16.msra.mxu0 0
    %1250 = vmatprep.subr.bf16.mxu0 0
    %1251 = vmatpush1.bf16.msra.mxu0 0
    %1252 = vmatprep.subr.bf16.mxu0 0
    %1253 = vmatpush1.bf16.msra.mxu0 0
    %1254 = vmatprep.subr.bf16.mxu0 0
    %1255 = vmatpush1.bf16.msra.mxu0 0
    %1256 = vmatprep.subr.bf16.mxu0 0
    %1257 = vmatpush1.bf16.msra.mxu0 0
    %1258 = vmatprep.subr.bf16.mxu0 0
    %1259 = vmatpush1.bf16.msra.mxu0 0
    %1260 = vmatprep.subr.bf16.mxu0 0
    %1261 = vmatpush1.bf16.msra.mxu0 0
    %1262 = vmatprep.mubr.bf16.mxu0 0
    %1263 = vmatmul.mubr.bf16.gmra.mrb[0].mxu0 %v1228
    %v1264 = vpop.f32.mrb[0].mxu0
    %v1265 = vadd.f32 %v1204, %v1264
    %v1266 = vpop.f32.mrb[0].mxu0
    %v1267 = vpop.f32.mrb[0].mxu0
    %v1268 = vadd.f32 %v1207, %v1267
    %v1269 = vpop.f32.mrb[0].mxu0
    %1270 = vdwg.mxu0
    %v1271 = vld [vmem:[#allocation2] sm:$0xe]
    %v1272 = vld [vmem:[#allocation2 + $0x8] sm:$0xe]
    %v1277 = vrot.slane %v1271, 5
    %v1278 = vrot.slane %v1277, 4
    %v1279 = vrot.slane %v1116, 5
    %v1280 = vsel %vm277, %v1278, %v1279
    %v1281 = vrot.slane %v1272, 5
    %v1282 = vrot.slane %v1281, 4
    %v1283 = vrot.slane %v1117, 5
    %v1284 = vsel %vm277, %v1282, %v1283
    %s1285 = scalar_lea.vmem [#allocation6], 192
    %v1286 = vld [vmem:[%s1285] sm:$0xf]
    %v1287 = vld [vmem:[%s1285 + $0x4] sm:$0xf]
    %v1288 = vld [vmem:[%s1285 + $0x8] sm:$0xf]
    %v1289 = vld [vmem:[%s1285 + $0xc] sm:$0xf]
    %v1290 = vunpack.c.l.b16 %v1280
    %v1291 = vunpack.c.l.b16 %v1284
    %v1292 = vpack.c.b16 %v1291, %v1290
    %v1297 = vunpack.c.l.b16 %v1286
    %v1298 = vunpack.c.l.b16 %v1287
    %v1299 = vunpack.c.l.b16 %v1288
    %v1300 = vunpack.c.l.b16 %v1289
    %v1301 = vpack.c.b16 %v1298, %v1297
    %v1302 = vpack.c.b16 %v1300, %v1299
    %v1306 = vsel %vm163, %v1292, 0
    %1308 = vmatprep.subr.bf16.mxu0 0
    %1309 = vmatpush1.bf16.msra.mxu0 %v1301
    %1310 = vmatprep.subr.bf16.mxu0 0
    %1311 = vmatpush1.bf16.msra.mxu0 %v1302
    %1312 = vmatprep.subr.bf16.mxu0 0
    %1313 = vmatpush1.bf16.msra.mxu0 0
    %1314 = vmatprep.subr.bf16.mxu0 0
    %1315 = vmatpush1.bf16.msra.mxu0 0
    %1316 = vmatprep.subr.bf16.mxu0 0
    %1317 = vmatpush1.bf16.msra.mxu0 0
    %1318 = vmatprep.subr.bf16.mxu0 0
    %1319 = vmatpush1.bf16.msra.mxu0 0
    %1320 = vmatprep.subr.bf16.mxu0 0
    %1321 = vmatpush1.bf16.msra.mxu0 0
    %1322 = vmatprep.subr.bf16.mxu0 0
    %1323 = vmatpush1.bf16.msra.mxu0 0
    %1324 = vmatprep.subr.bf16.mxu0 0
    %1325 = vmatpush1.bf16.msra.mxu0 0
    %1326 = vmatprep.subr.bf16.mxu0 0
    %1327 = vmatpush1.bf16.msra.mxu0 0
    %1328 = vmatprep.subr.bf16.mxu0 0
    %1329 = vmatpush1.bf16.msra.mxu0 0
    %1330 = vmatprep.subr.bf16.mxu0 0
    %1331 = vmatpush1.bf16.msra.mxu0 0
    %1332 = vmatprep.subr.bf16.mxu0 0
    %1333 = vmatpush1.bf16.msra.mxu0 0
    %1334 = vmatprep.subr.bf16.mxu0 0
    %1335 = vmatpush1.bf16.msra.mxu0 0
    %1336 = vmatprep.subr.bf16.mxu0 0
    %1337 = vmatpush1.bf16.msra.mxu0 0
    %1338 = vmatprep.subr.bf16.mxu0 0
    %1339 = vmatpush1.bf16.msra.mxu0 0
    %1340 = vmatprep.mubr.bf16.mxu0 0
    %1341 = vmatmul.mubr.bf16.gmra.mrb[0].mxu0 %v1306
    %v1342 = vpop.f32.mrb[0].mxu0
    %v1343 = vadd.f32 0.0, %v1342
    %v1344 = vpop.f32.mrb[0].mxu0
    %v1345 = vpop.f32.mrb[0].mxu0
    %v1346 = vadd.f32 0.0, %v1345
    %v1347 = vpop.f32.mrb[0].mxu0
    %1348 = vdwg.mxu0
    %v1349 = vadd.f32 %v1265, %v1343
    %v1350 = vadd.f32 %v1268, %v1346
    %v1351 = vld [vmem:[#allocation2 + $0x4] sm:$0x3]
    %v1352 = vld [vmem:[#allocation2 + $0xc] sm:$0x3]
    %v1354 = vshrl.u32 %v1271, 16
    %v1356 = vrot.slane %v1354, 5
    %v1357 = vshll.u32 %v1271, 16
    %v1359 = vrot.slane %v1357, 6
    %v1360 = vor.u32 %v1356, %v1359
    %v1361 = vrot.slane %v1360, 4
    %v1363 = vshrl.u32 %v1351, 16
    %v1365 = vrot.slane %v1363, 5
    %v1366 = vshll.u32 %v1351, 16
    %v1368 = vrot.slane %v1366, 6
    %v1369 = vor.u32 %v1365, %v1368
    %v1370 = vsel %vm356, %v1361, %v1369
    %v1372 = vshrl.u32 %v1272, 16
    %v1374 = vrot.slane %v1372, 5
    %v1375 = vshll.u32 %v1272, 16
    %v1377 = vrot.slane %v1375, 6
    %v1378 = vor.u32 %v1374, %v1377
    %v1379 = vrot.slane %v1378, 4
    %v1381 = vshrl.u32 %v1352, 16
    %v1383 = vrot.slane %v1381, 5
    %v1384 = vshll.u32 %v1352, 16
    %v1386 = vrot.slane %v1384, 6
    %v1387 = vor.u32 %v1383, %v1386
    %v1388 = vsel %vm356, %v1379, %v1387
    %s1389 = scalar_lea.vmem [#allocation6], 208
    %v1390 = vld [vmem:[%s1389] sm:$0xf]
    %v1391 = vld [vmem:[%s1389 + $0x4] sm:$0xf]
    %v1392 = vld [vmem:[%s1389 + $0x8] sm:$0xf]
    %v1393 = vld [vmem:[%s1389 + $0xc] sm:$0xf]
    %v1394 = vunpack.c.l.b16 %v1370
    %v1395 = vunpack.c.l.b16 %v1388
    %v1396 = vpack.c.b16 %v1395, %v1394
    %v1401 = vunpack.c.l.b16 %v1390
    %v1402 = vunpack.c.l.b16 %v1391
    %v1403 = vunpack.c.l.b16 %v1392
    %v1404 = vunpack.c.l.b16 %v1393
    %v1405 = vpack.c.b16 %v1402, %v1401
    %v1406 = vpack.c.b16 %v1404, %v1403
    %v1410 = vsel %vm163, %v1396, 0
    %1412 = vmatprep.subr.bf16.mxu0 0
    %1413 = vmatpush1.bf16.msra.mxu0 %v1405
    %1414 = vmatprep.subr.bf16.mxu0 0
    %1415 = vmatpush1.bf16.msra.mxu0 %v1406
    %1416 = vmatprep.subr.bf16.mxu0 0
    %1417 = vmatpush1.bf16.msra.mxu0 0
    %1418 = vmatprep.subr.bf16.mxu0 0
    %1419 = vmatpush1.bf16.msra.mxu0 0
    %1420 = vmatprep.subr.bf16.mxu0 0
    %1421 = vmatpush1.bf16.msra.mxu0 0
    %1422 = vmatprep.subr.bf16.mxu0 0
    %1423 = vmatpush1.bf16.msra.mxu0 0
    %1424 = vmatprep.subr.bf16.mxu0 0
    %1425 = vmatpush1.bf16.msra.mxu0 0
    %1426 = vmatprep.subr.bf16.mxu0 0
    %1427 = vmatpush1.bf16.msra.mxu0 0
    %1428 = vmatprep.subr.bf16.mxu0 0
    %1429 = vmatpush1.bf16.msra.mxu0 0
    %1430 = vmatprep.subr.bf16.mxu0 0
    %1431 = vmatpush1.bf16.msra.mxu0 0
    %1432 = vmatprep.subr.bf16.mxu0 0
    %1433 = vmatpush1.bf16.msra.mxu0 0
    %1434 = vmatprep.subr.bf16.mxu0 0
    %1435 = vmatpush1.bf16.msra.mxu0 0
    %1436 = vmatprep.subr.bf16.mxu0 0
    %1437 = vmatpush1.bf16.msra.mxu0 0
    %1438 = vmatprep.subr.bf16.mxu0 0
    %1439 = vmatpush1.bf16.msra.mxu0 0
    %1440 = vmatprep.subr.bf16.mxu0 0
    %1441 = vmatpush1.bf16.msra.mxu0 0
    %1442 = vmatprep.subr.bf16.mxu0 0
    %1443 = vmatpush1.bf16.msra.mxu0 0
    %1444 = vmatprep.mubr.bf16.mxu0 0
    %1445 = vmatmul.mubr.bf16.gmra.mrb[0].mxu0 %v1410
    %v1446 = vpop.f32.mrb[0].mxu0
    %v1447 = vadd.f32 0.0, %v1446
    %v1448 = vpop.f32.mrb[0].mxu0
    %v1449 = vpop.f32.mrb[0].mxu0
    %v1450 = vadd.f32 0.0, %v1449
    %v1451 = vpop.f32.mrb[0].mxu0
    %1452 = vdwg.mxu0
    %v1453 = vadd.f32 %v1349, %v1447
    %v1454 = vadd.f32 %v1350, %v1450
    %v1455 = vld [vmem:[#allocation2] sm:$0xc]
    %v1456 = vld [vmem:[#allocation2 + $0x8] sm:$0xc]
    %v1461 = vrot.slane %v1455, 6
    %v1462 = vrot.slane %v1461, 4
    %v1463 = vrot.slane %v1351, 6
    %v1464 = vsel %vm467, %v1462, %v1463
    %v1465 = vrot.slane %v1456, 6
    %v1466 = vrot.slane %v1465, 4
    %v1467 = vrot.slane %v1352, 6
    %v1468 = vsel %vm467, %v1466, %v1467
    %s1469 = scalar_lea.vmem [#allocation6], 224
    %v1470 = vld [vmem:[%s1469] sm:$0xf]
    %v1471 = vld [vmem:[%s1469 + $0x4] sm:$0xf]
    %v1472 = vld [vmem:[%s1469 + $0x8] sm:$0xf]
    %v1473 = vld [vmem:[%s1469 + $0xc] sm:$0xf]
    %v1474 = vunpack.c.l.b16 %v1464
    %v1475 = vunpack.c.l.b16 %v1468
    %v1476 = vpack.c.b16 %v1475, %v1474
    %v1481 = vunpack.c.l.b16 %v1470
    %v1482 = vunpack.c.l.b16 %v1471
    %v1483 = vunpack.c.l.b16 %v1472
    %v1484 = vunpack.c.l.b16 %v1473
    %v1485 = vpack.c.b16 %v1482, %v1481
    %v1486 = vpack.c.b16 %v1484, %v1483
    %v1490 = vsel %vm163, %v1476, 0
    %1492 = vmatprep.subr.bf16.mxu0 0
    %1493 = vmatpush1.bf16.msra.mxu0 %v1485
    %1494 = vmatprep.subr.bf16.mxu0 0
    %1495 = vmatpush1.bf16.msra.mxu0 %v1486
    %1496 = vmatprep.subr.bf16.mxu0 0
    %1497 = vmatpush1.bf16.msra.mxu0 0
    %1498 = vmatprep.subr.bf16.mxu0 0
    %1499 = vmatpush1.bf16.msra.mxu0 0
    %1500 = vmatprep.subr.bf16.mxu0 0
    %1501 = vmatpush1.bf16.msra.mxu0 0
    %1502 = vmatprep.subr.bf16.mxu0 0
    %1503 = vmatpush1.bf16.msra.mxu0 0
    %1504 = vmatprep.subr.bf16.mxu0 0
    %1505 = vmatpush1.bf16.msra.mxu0 0
    %1506 = vmatprep.subr.bf16.mxu0 0
    %1507 = vmatpush1.bf16.msra.mxu0 0
    %1508 = vmatprep.subr.bf16.mxu0 0
    %1509 = vmatpush1.bf16.msra.mxu0 0
    %1510 = vmatprep.subr.bf16.mxu0 0
    %1511 = vmatpush1.bf16.msra.mxu0 0
    %1512 = vmatprep.subr.bf16.mxu0 0
    %1513 = vmatpush1.bf16.msra.mxu0 0
    %1514 = vmatprep.subr.bf16.mxu0 0
    %1515 = vmatpush1.bf16.msra.mxu0 0
    %1516 = vmatprep.subr.bf16.mxu0 0
    %1517 = vmatpush1.bf16.msra.mxu0 0
    %1518 = vmatprep.subr.bf16.mxu0 0
    %1519 = vmatpush1.bf16.msra.mxu0 0
    %1520 = vmatprep.subr.bf16.mxu0 0
    %1521 = vmatpush1.bf16.msra.mxu0 0
    %1522 = vmatprep.subr.bf16.mxu0 0
    %1523 = vmatpush1.bf16.msra.mxu0 0
    %1524 = vmatprep.mubr.bf16.mxu0 0
    %1525 = vmatmul.mubr.bf16.gmra.mrb[0].mxu0 %v1490
    %v1526 = vpop.f32.mrb[0].mxu0
    %v1527 = vadd.f32 0.0, %v1526
    %v1528 = vpop.f32.mrb[0].mxu0
    %v1529 = vpop.f32.mrb[0].mxu0
    %v1530 = vadd.f32 0.0, %v1529
    %v1531 = vpop.f32.mrb[0].mxu0
    %1532 = vdwg.mxu0
    %v1533 = vadd.f32 %v1453, %v1527
    %v1534 = vadd.f32 %v1454, %v1530
    %v1535 = vsel %vm163, %v1533, 0.0
    %v1536 = vsel %vm163, %v1534, 0.0
    %v1537 = vadd.f32 %v1535, %v1536
    %v1538 = vrot.slane %v1537, 4
    %v1539 = vadd.f32 %v1537, %v1538
    %v1540 = vrot.slane %v1539, 2
    %v1541 = vadd.f32 %v1539, %v1540
    %v1542 = vrot.slane %v1541, 1
    %v1543 = vadd.f32 %v1541, %v1542
    %v1544 = vmul.f32 %v1543, %v551
    %v1545 = vsub.f32 %v1533, %v1544
    %v1546 = vsub.f32 %v1534, %v1544
    %v1547 = vmul.f32 %v1545, %v1545
    %v1548 = vmul.f32 %v1546, %v1546
    %v1549 = vsel %vm163, %v1547, 0.0
    %v1550 = vsel %vm163, %v1548, 0.0
    %v1551 = vadd.f32 %v1549, %v1550
    %v1552 = vrot.slane %v1551, 4
    %v1553 = vadd.f32 %v1551, %v1552
    %v1554 = vrot.slane %v1553, 2
    %v1555 = vadd.f32 %v1553, %v1554
    %v1556 = vrot.slane %v1555, 1
    %v1557 = vadd.f32 %v1555, %v1556
    %v1558 = vmul.f32 %v1557, %v551
    %s1559 = scalar_lea.vmem [#allocation8], 2
    %v1560 = vld [vmem:[%s1559] sm:$0x1]
    %v1561 = vadd.f32 %v1558, 1e-05
    %v1562 = vrsqrt.pop %v1561
    %v1563 = vmul.f32 %v1560, %v1562
    %s1564 = scalar_lea.vmem [#allocation9], 2
    %v1565 = vld [vmem:[%s1564] sm:$0x1]
    %v1566 = vmul.f32 %v1544, %v1563
    %v1567 = vsub.f32 %v1565, %v1566
    %v1569 = vlaneseq
    %v1570 = vshrl.u32 %v1569, 7
    %v1571 = vsub.s32 0, %v1570
    %v1572 = vrot.slane %v1563, %v1571
    %v1574 = vmul.f32 %v1533, %v1572
    %v1575 = vmul.f32 %v1534, %v1572
    %v1577 = vlaneseq
    %v1578 = vshrl.u32 %v1577, 7
    %v1579 = vsub.s32 0, %v1578
    %v1580 = vrot.slane %v1567, %v1579
    %v1582 = vadd.f32 %v1574, %v1580
    %v1583 = vadd.f32 %v1575, %v1580
    %v1584 = vmax.f32 %v1582, 0.0
    %v1585 = vmax.f32 %v1583, 0.0
    %1586 = vst.msk [vmem:[#allocation11] sm:$0xff] %vm163, %v1584
    %1587 = vst.msk [vmem:[#allocation11 + $0x8] sm:$0xff] %vm163, %v1585
    // Predicated region
    $region34: #{tpu_custom_call.1} parent=1 // pred_check
      _
    $region35: #{tpu_custom_call.1} parent=1 // pred_check_branch
      %1589 = sbr.rel (0) target = $region37
    $region36: #{tpu_custom_call.1} parent=1 // pred_region
      %s1591 = ssub.s32 256, 256
      %1592 = vsyncadd [#allocation5], %s1591
      %s1593 = sshll.u32 [#allocation11], 4
      %s1594 = int_to_ptr.vmem [resolvable:$true] %s1593
      %1599 = dma.vmem_to_hbm [thread:$0]  %s1594, 256, %s4, [#allocation5], 128, 128, 8
    $region37: #{tpu_custom_call.1} parent=1 // pred_fallthru
      _
    // Predicated region
    $region38: #{tpu_custom_call.1} parent=1 // pred_check
      _
    $region39: #{tpu_custom_call.1} parent=1 // pred_check_branch
      %1601 = sbr.rel (0) target = $region41
    $region40: #{tpu_custom_call.1} parent=1 // pred_region
      %1602 = dma.done [#allocation5], 256
    $region41: #{tpu_custom_call.1} parent=1 // pred_fallthru
      _
    %1603 = vsyncpa [#allocation4], 1
    %1604 = vsyncpa [#allocation7], 1
    %1605 = vsyncpa [#allocation10], 1
    %1606 = vsyncpa [#allocation5], 1

</llo_original>
